<compile_context>
chip_gen: v6e
topology: v6e:2x2x1
jax: 0.10.0
libtpu: 0.0.40
codegen_flags: <defaults>
</compile_context>

<pallas_src>
import math
from functools import partial

import jax
import jax.numpy as jnp
from jax.experimental import pallas as pl
from jax.experimental.pallas import tpu as pltpu  # noqa: F401  (used when scaling up)


# --------------------------- Fused MHA kernel ------------------------------ #
def _mha_fused_kernel(q_ref, kv_ref, wq_ref, wk_ref, wv_ref, wo_ref, bo_ref, o_ref,
                      *, n_heads, head_dim, scale):
    # Refs (single grid step, full arrays resident in VMEM):
    #   q_ref : (B, NQ, Dq)     kv_ref: (B, NKV, Dkv)
    #   wq_ref: (Dq, D)         wk_ref/wv_ref: (Dkv, D)    wo_ref: (D, D)
    #   bo_ref: (1, D)          o_ref : (B, NQ, D)
    B, NQ, Dq = q_ref.shape
    _, NKV, Dkv = kv_ref.shape
    D = wo_ref.shape[1]

    # ---- Projections: flatten batch into MXU rows; kv_in read once from VMEM.
    q_flat = q_ref[...].reshape(B * NQ, Dq)
    kv_flat = kv_ref[...].reshape(B * NKV, Dkv)

    q = jnp.dot(q_flat, wq_ref[...], preferred_element_type=jnp.float32) * scale
    k = jnp.dot(kv_flat, wk_ref[...], preferred_element_type=jnp.float32)
    v = jnp.dot(kv_flat, wv_ref[...], preferred_element_type=jnp.float32)

    # ---- Heads-batched attention over BH = B * n_heads:
    #      two batched dots + one softmax instead of a per-head loop.
    def split_heads(x, n_rows):
        # (B*n_rows, D) -> (B*H, n_rows, hd): lane slices stacked along a new
        # LEADING axis (leading-axis concat + leading-dim reshapes only; no
        # lane-dim splits).
        parts = [
            x[:, h * head_dim:(h + 1) * head_dim].reshape(B, 1, n_rows, head_dim)
            for h in range(n_heads)
        ]
        return jnp.concatenate(parts, axis=1).reshape(B * n_heads, n_rows, head_dim)

    qh = split_heads(q, NQ)     # (BH, NQ,  hd)  -- already scaled by 1/sqrt(hd)
    kh = split_heads(k, NKV)    # (BH, NKV, hd)
    vh = split_heads(v, NKV)    # (BH, NKV, hd)

    # Scores for ALL heads in one batched dot (contract last axes of Q and K).
    s = jnp.einsum("bqd,bkd->bqk", qh, kh,
                   preferred_element_type=jnp.float32)            # (BH, NQ, NKV)

    m = jnp.max(s, axis=-1, keepdims=True)
    p = jnp.exp(s - m)
    denom = jnp.sum(p, axis=-1, keepdims=True)
    p = p * pl.reciprocal(denom, approx=True)                     # EUP, not VALU div

    # P @ V for all heads in one batched dot.
    o = jnp.einsum("bqk,bkd->bqd", p, vh,
                   preferred_element_type=jnp.float32)            # (BH, NQ, hd)

    # ---- Re-assemble heads lane-contiguously; ONE output projection matmul.
    o = o.reshape(B, n_heads, NQ, head_dim)
    o = jnp.concatenate([o[:, h] for h in range(n_heads)], axis=-1)  # (B, NQ, D)
    out = jnp.dot(o.reshape(B * NQ, D), wo_ref[...],
                  preferred_element_type=jnp.float32) + bo_ref[...]
    o_ref[...] = out.reshape(B, NQ, D).astype(o_ref.dtype)


def mha_forward(q_in, kv_in, params, n_heads):
    """q_in: (B, NQ, Dq), kv_in: (B, NKV, Dkv) -> (B, NQ, dim_out)."""
    B, NQ, dq = q_in.shape
    _, NKV, dkv = kv_in.shape
    dim_out = params["wq"].shape[1]
    head_dim = dim_out // n_heads
    scale = 1.0 / math.sqrt(head_dim)

    bo = params["bo"].reshape(1, dim_out)   # metadata-only reshape (no HBM copy)

    kernel = partial(_mha_fused_kernel,
                     n_heads=n_heads, head_dim=head_dim, scale=scale)

    # Single grid step: every operand is a full-array VMEM block.
    return pl.pallas_call(
        kernel,
        out_shape=jax.ShapeDtypeStruct((B, NQ, dim_out), q_in.dtype),
        in_specs=[
            pl.BlockSpec((B, NQ, dq), lambda: (0, 0, 0)),
            pl.BlockSpec((B, NKV, dkv), lambda: (0, 0, 0)),
            pl.BlockSpec((dq, dim_out), lambda: (0, 0)),
            pl.BlockSpec((dkv, dim_out), lambda: (0, 0)),
            pl.BlockSpec((dkv, dim_out), lambda: (0, 0)),
            pl.BlockSpec((dim_out, dim_out), lambda: (0, 0)),
            pl.BlockSpec((1, dim_out), lambda: (0, 0)),
        ],
        out_specs=pl.BlockSpec((B, NQ, dim_out), lambda: (0, 0, 0)),
    )(q_in, kv_in, params["wq"], params["wk"], params["wv"], params["wo"], bo)


# -------------------------- Pure-JAX reference ----------------------------- #
def mha_reference(q_in, kv_in, params, n_heads):
    B, NQ, _ = q_in.shape
    _, NKV, _ = kv_in.shape
    dim_out = params["wq"].shape[1]
    head_dim = dim_out // n_heads

    q = q_in @ params["wq"]                      # bias=False in the module
    k = kv_in @ params["wk"]
    v = kv_in @ params["wv"]

    qh = q.reshape(B, NQ, n_heads, head_dim).transpose(0, 2, 1, 3)
    kh = k.reshape(B, NKV, n_heads, head_dim).transpose(0, 2, 1, 3)
    vh = v.reshape(B, NKV, n_heads, head_dim).transpose(0, 2, 1, 3)

    s = jnp.einsum("bhqd,bhkd->bhqk", qh, kh) / math.sqrt(head_dim)
    p = jax.nn.softmax(s, axis=-1)
    o = jnp.einsum("bhqk,bhkd->bhqd", p, vh)
    o = o.transpose(0, 2, 1, 3).reshape(B, NQ, dim_out)
    return o @ params["wo"] + params["bo"]       # output linear has bias=True


# --------------------------------- Main ------------------------------------ #
if __name__ == "__main__":
    # Module config (matches MHA.__init__): dim_query_in, dim_kv_in, dim_out, n_heads
    dim_query_in, dim_kv_in, dim_out, n_heads = 32, 16, 32, 4
    B, NQ, NKV = 2, 8, 8

    key = jax.random.PRNGKey(0)
    keys = jax.random.split(key, 7)

    # q/k/v linears have bias=False (module default); output linear has bias=True.
    params = {
        "wq": 0.05 * jax.random.normal(keys[0], (dim_query_in, dim_out), jnp.float32),
        "wk": 0.05 * jax.random.normal(keys[1], (dim_kv_in, dim_out), jnp.float32),
        "wv": 0.05 * jax.random.normal(keys[2], (dim_kv_in, dim_out), jnp.float32),
        "wo": 0.05 * jax.random.normal(keys[3], (dim_out, dim_out), jnp.float32),
        "bo": 0.01 * jax.random.normal(keys[4], (dim_out,), jnp.float32),
    }

    q_in = jax.random.normal(keys[5], (B, NQ, dim_query_in), jnp.float32)
    kv_in = jax.random.normal(keys[6], (B, NKV, dim_kv_in), jnp.float32)

    out = jax.block_until_ready(mha_forward(q_in, kv_in, params, n_heads))
    ref = mha_reference(q_in, kv_in, params, n_heads)

    assert out.shape == (B, NQ, dim_out)
    # Tolerance accounts for the approximate (EUP) reciprocal in the softmax denom.
    assert jnp.allclose(out, ref, atol=2e-3, rtol=2e-3), "Pallas MHA mismatch vs reference"
    print("KERNEL_OK")
</pallas_src>

<mosaic_0001>
module attributes {stable_mosaic.version = 11 : i64} {
  func.func @_mha_fused_kernel(%arg0: memref<2x8x32xf32, #tpu.memory_space<vmem>>, %arg1: memref<2x8x16xf32, #tpu.memory_space<vmem>>, %arg2: memref<32x32xf32, #tpu.memory_space<vmem>>, %arg3: memref<16x32xf32, #tpu.memory_space<vmem>>, %arg4: memref<16x32xf32, #tpu.memory_space<vmem>>, %arg5: memref<32x32xf32, #tpu.memory_space<vmem>>, %arg6: memref<1x32xf32, #tpu.memory_space<vmem>>, %arg7: memref<2x8x32xf32, #tpu.memory_space<vmem>>) attributes {dimension_semantics = [], scalar_prefetch = 0 : i64, scratch_operands = 0 : i64, tpu.core_type = #tpu.core_type<tc>} {
    %c0 = arith.constant 0 : index
    %c0_0 = arith.constant 0 : index
    %c0_1 = arith.constant 0 : index
    %0 = vector.load %arg0[%c0, %c0_0, %c0_1] : memref<2x8x32xf32, #tpu.memory_space<vmem>>, vector<2x8x32xf32>
    %1 = vector.shape_cast %0 : vector<2x8x32xf32> to vector<16x32xf32>
    %c0_2 = arith.constant 0 : index
    %c0_3 = arith.constant 0 : index
    %c0_4 = arith.constant 0 : index
    %2 = vector.load %arg1[%c0_2, %c0_3, %c0_4] : memref<2x8x16xf32, #tpu.memory_space<vmem>>, vector<2x8x16xf32>
    %3 = vector.shape_cast %2 : vector<2x8x16xf32> to vector<16x16xf32>
    %c0_5 = arith.constant 0 : index
    %c0_6 = arith.constant 0 : index
    %4 = vector.load %arg2[%c0_5, %c0_6] : memref<32x32xf32, #tpu.memory_space<vmem>>, vector<32x32xf32>
    %cst = arith.constant dense<0.000000e+00> : vector<16x32xf32>
    %5 = tpu.matmul %1, %4, %cst {dimension_numbers = #tpu.dot_dimension_numbers<[1], [0], [0], [1], [0, 0, 1, 1], [], []>} : vector<16x32xf32>, vector<32x32xf32>, vector<16x32xf32> -> vector<16x32xf32>
    %cst_7 = arith.constant 0.353553385 : f32
    %6 = vector.broadcast %cst_7 : f32 to vector<16x32xf32>
    %7 = arith.mulf %5, %6 : vector<16x32xf32>
    %c0_8 = arith.constant 0 : index
    %c0_9 = arith.constant 0 : index
    %8 = vector.load %arg3[%c0_8, %c0_9] : memref<16x32xf32, #tpu.memory_space<vmem>>, vector<16x32xf32>
    %cst_10 = arith.constant dense<0.000000e+00> : vector<16x32xf32>
    %9 = tpu.matmul %3, %8, %cst_10 {dimension_numbers = #tpu.dot_dimension_numbers<[1], [0], [0], [1], [0, 0, 1, 1], [], []>} : vector<16x16xf32>, vector<16x32xf32>, vector<16x32xf32> -> vector<16x32xf32>
    %c0_11 = arith.constant 0 : index
    %c0_12 = arith.constant 0 : index
    %10 = vector.load %arg4[%c0_11, %c0_12] : memref<16x32xf32, #tpu.memory_space<vmem>>, vector<16x32xf32>
    %cst_13 = arith.constant dense<0.000000e+00> : vector<16x32xf32>
    %11 = tpu.matmul %3, %10, %cst_13 {dimension_numbers = #tpu.dot_dimension_numbers<[1], [0], [0], [1], [0, 0, 1, 1], [], []>} : vector<16x16xf32>, vector<16x32xf32>, vector<16x32xf32> -> vector<16x32xf32>
    %12 = vector.extract_strided_slice %7 {offsets = [0, 0], sizes = [16, 8], strides = [1, 1]} : vector<16x32xf32> to vector<16x8xf32>
    %13 = vector.shape_cast %12 : vector<16x8xf32> to vector<2x1x8x8xf32>
    %14 = vector.extract_strided_slice %7 {offsets = [0, 8], sizes = [16, 8], strides = [1, 1]} : vector<16x32xf32> to vector<16x8xf32>
    %15 = vector.shape_cast %14 : vector<16x8xf32> to vector<2x1x8x8xf32>
    %16 = vector.extract_strided_slice %7 {offsets = [0, 16], sizes = [16, 8], strides = [1, 1]} : vector<16x32xf32> to vector<16x8xf32>
    %17 = vector.shape_cast %16 : vector<16x8xf32> to vector<2x1x8x8xf32>
    %18 = vector.extract_strided_slice %7 {offsets = [0, 24], sizes = [16, 8], strides = [1, 1]} : vector<16x32xf32> to vector<16x8xf32>
    %19 = vector.shape_cast %18 : vector<16x8xf32> to vector<2x1x8x8xf32>
    %20 = tpu.concatenate %13, %15, %17, %19 in 1 : vector<2x1x8x8xf32>, vector<2x1x8x8xf32>, vector<2x1x8x8xf32>, vector<2x1x8x8xf32> -> vector<2x4x8x8xf32>
    %21 = vector.shape_cast %20 : vector<2x4x8x8xf32> to vector<8x8x8xf32>
    %22 = vector.extract_strided_slice %9 {offsets = [0, 0], sizes = [16, 8], strides = [1, 1]} : vector<16x32xf32> to vector<16x8xf32>
    %23 = vector.shape_cast %22 : vector<16x8xf32> to vector<2x1x8x8xf32>
    %24 = vector.extract_strided_slice %9 {offsets = [0, 8], sizes = [16, 8], strides = [1, 1]} : vector<16x32xf32> to vector<16x8xf32>
    %25 = vector.shape_cast %24 : vector<16x8xf32> to vector<2x1x8x8xf32>
    %26 = vector.extract_strided_slice %9 {offsets = [0, 16], sizes = [16, 8], strides = [1, 1]} : vector<16x32xf32> to vector<16x8xf32>
    %27 = vector.shape_cast %26 : vector<16x8xf32> to vector<2x1x8x8xf32>
    %28 = vector.extract_strided_slice %9 {offsets = [0, 24], sizes = [16, 8], strides = [1, 1]} : vector<16x32xf32> to vector<16x8xf32>
    %29 = vector.shape_cast %28 : vector<16x8xf32> to vector<2x1x8x8xf32>
    %30 = tpu.concatenate %23, %25, %27, %29 in 1 : vector<2x1x8x8xf32>, vector<2x1x8x8xf32>, vector<2x1x8x8xf32>, vector<2x1x8x8xf32> -> vector<2x4x8x8xf32>
    %31 = vector.shape_cast %30 : vector<2x4x8x8xf32> to vector<8x8x8xf32>
    %32 = vector.extract_strided_slice %11 {offsets = [0, 0], sizes = [16, 8], strides = [1, 1]} : vector<16x32xf32> to vector<16x8xf32>
    %33 = vector.shape_cast %32 : vector<16x8xf32> to vector<2x1x8x8xf32>
    %34 = vector.extract_strided_slice %11 {offsets = [0, 8], sizes = [16, 8], strides = [1, 1]} : vector<16x32xf32> to vector<16x8xf32>
    %35 = vector.shape_cast %34 : vector<16x8xf32> to vector<2x1x8x8xf32>
    %36 = vector.extract_strided_slice %11 {offsets = [0, 16], sizes = [16, 8], strides = [1, 1]} : vector<16x32xf32> to vector<16x8xf32>
    %37 = vector.shape_cast %36 : vector<16x8xf32> to vector<2x1x8x8xf32>
    %38 = vector.extract_strided_slice %11 {offsets = [0, 24], sizes = [16, 8], strides = [1, 1]} : vector<16x32xf32> to vector<16x8xf32>
    %39 = vector.shape_cast %38 : vector<16x8xf32> to vector<2x1x8x8xf32>
    %40 = tpu.concatenate %33, %35, %37, %39 in 1 : vector<2x1x8x8xf32>, vector<2x1x8x8xf32>, vector<2x1x8x8xf32>, vector<2x1x8x8xf32> -> vector<2x4x8x8xf32>
    %41 = vector.shape_cast %40 : vector<2x4x8x8xf32> to vector<8x8x8xf32>
    "tpu.trace_start"() <{level = 10 : i32, message = "bqd,bkd->bqk"}> : () -> ()
    %cst_14 = arith.constant dense<0.000000e+00> : vector<8x8x8xf32>
    %42 = tpu.matmul %21, %31, %cst_14 {dimension_numbers = #tpu.dot_dimension_numbers<[2], [2], [1], [1], [0, 0, 0, 1, 1, 1], [0], [0]>} : vector<8x8x8xf32>, vector<8x8x8xf32>, vector<8x8x8xf32> -> vector<8x8x8xf32>
    "tpu.trace_stop"() : () -> ()
    %cst_15 = arith.constant dense<0xFF800000> : vector<8x8xf32>
    %43 = vector.multi_reduction <maximumf>, %42, %cst_15 [2] : vector<8x8x8xf32> to vector<8x8xf32>
    %44 = vector.shape_cast %43 : vector<8x8xf32> to vector<8x8x1xf32>
    %45 = vector.broadcast %44 : vector<8x8x1xf32> to vector<8x8x8xf32>
    %46 = arith.subf %42, %45 : vector<8x8x8xf32>
    %47 = math.exp %46 : vector<8x8x8xf32>
    %cst_16 = arith.constant dense<0.000000e+00> : vector<8x8xf32>
    %48 = vector.multi_reduction <add>, %47, %cst_16 [2] : vector<8x8x8xf32> to vector<8x8xf32>
    %49 = vector.shape_cast %48 : vector<8x8xf32> to vector<8x8x1xf32>
    %50 = tpu.reciprocal %49 {approx = true} : vector<8x8x1xf32> -> vector<8x8x1xf32>
    %51 = vector.broadcast %50 : vector<8x8x1xf32> to vector<8x8x8xf32>
    %52 = arith.mulf %47, %51 : vector<8x8x8xf32>
    "tpu.trace_start"() <{level = 10 : i32, message = "bqk,bkd->bqd"}> : () -> ()
    %cst_17 = arith.constant dense<0.000000e+00> : vector<8x8x8xf32>
    %53 = tpu.matmul %52, %41, %cst_17 {dimension_numbers = #tpu.dot_dimension_numbers<[2], [1], [1], [2], [0, 0, 0, 1, 1, 2], [0], [0]>} : vector<8x8x8xf32>, vector<8x8x8xf32>, vector<8x8x8xf32> -> vector<8x8x8xf32>
    "tpu.trace_stop"() : () -> ()
    %54 = vector.shape_cast %53 : vector<8x8x8xf32> to vector<2x4x8x8xf32>
    %55 = vector.extract_strided_slice %54 {offsets = [0, 0, 0, 0], sizes = [2, 1, 8, 8], strides = [1, 1, 1, 1]} : vector<2x4x8x8xf32> to vector<2x1x8x8xf32>
    %56 = vector.shape_cast %55 : vector<2x1x8x8xf32> to vector<2x8x8xf32>
    %57 = vector.extract_strided_slice %54 {offsets = [0, 1, 0, 0], sizes = [2, 1, 8, 8], strides = [1, 1, 1, 1]} : vector<2x4x8x8xf32> to vector<2x1x8x8xf32>
    %58 = vector.shape_cast %57 : vector<2x1x8x8xf32> to vector<2x8x8xf32>
    %59 = vector.extract_strided_slice %54 {offsets = [0, 2, 0, 0], sizes = [2, 1, 8, 8], strides = [1, 1, 1, 1]} : vector<2x4x8x8xf32> to vector<2x1x8x8xf32>
    %60 = vector.shape_cast %59 : vector<2x1x8x8xf32> to vector<2x8x8xf32>
    %61 = vector.extract_strided_slice %54 {offsets = [0, 3, 0, 0], sizes = [2, 1, 8, 8], strides = [1, 1, 1, 1]} : vector<2x4x8x8xf32> to vector<2x1x8x8xf32>
    %62 = vector.shape_cast %61 : vector<2x1x8x8xf32> to vector<2x8x8xf32>
    %63 = tpu.concatenate %56, %58, %60, %62 in 2 : vector<2x8x8xf32>, vector<2x8x8xf32>, vector<2x8x8xf32>, vector<2x8x8xf32> -> vector<2x8x32xf32>
    %64 = vector.shape_cast %63 : vector<2x8x32xf32> to vector<16x32xf32>
    %c0_18 = arith.constant 0 : index
    %c0_19 = arith.constant 0 : index
    %65 = vector.load %arg5[%c0_18, %c0_19] : memref<32x32xf32, #tpu.memory_space<vmem>>, vector<32x32xf32>
    %cst_20 = arith.constant dense<0.000000e+00> : vector<16x32xf32>
    %66 = tpu.matmul %64, %65, %cst_20 {dimension_numbers = #tpu.dot_dimension_numbers<[1], [0], [0], [1], [0, 0, 1, 1], [], []>} : vector<16x32xf32>, vector<32x32xf32>, vector<16x32xf32> -> vector<16x32xf32>
    %c0_21 = arith.constant 0 : index
    %c0_22 = arith.constant 0 : index
    %67 = vector.load %arg6[%c0_21, %c0_22] : memref<1x32xf32, #tpu.memory_space<vmem>>, vector<1x32xf32>
    %68 = vector.broadcast %67 : vector<1x32xf32> to vector<16x32xf32>
    %69 = arith.addf %66, %68 : vector<16x32xf32>
    %70 = vector.shape_cast %69 : vector<16x32xf32> to vector<2x8x32xf32>
    %c0_23 = arith.constant 0 : index
    %c0_24 = arith.constant 0 : index
    %c0_25 = arith.constant 0 : index
    %71 = vector.load %arg7[%c0_23, %c0_24, %c0_25] : memref<2x8x32xf32, #tpu.memory_space<vmem>>, vector<2x8x32xf32>
    tpu.vector_store %arg7[%c0_23, %c0_24, %c0_25], %70 {strides = array<i32>} : memref<2x8x32xf32, #tpu.memory_space<vmem>>, vector<2x8x32xf32>,
    return
  }
}

</mosaic_0001>

<llo_original>
// kernel: tpu_custom_call.1
$region0: #{tpu_custom_call.1}
  #allocation0 [shape = 'u32[]', space=smem, size = 0x4, offset = 0x4, fixed_abs, tag = 'smem constant byte address 0x4 - core index']
  #allocation1 [shape = 'u32[144,128]{1,0:T(1,128)}', space=vmem, size = 0x12000, scoped, tag = 'internal scratch']
  %s0 = inlined_call_operand.hbm [shape: f32[2,8,32], index: 0, kind: input, shape index: {}]
  %s1 = inlined_call_operand.hbm [shape: f32[2,8,16], index: 1, kind: input, shape index: {}]
  %s2 = inlined_call_operand.hbm [shape: f32[32,32], index: 2, kind: input, shape index: {}]
  %s3 = inlined_call_operand.hbm [shape: f32[16,32], index: 3, kind: input, shape index: {}]
  %s4 = inlined_call_operand.hbm [shape: f32[16,32], index: 4, kind: input, shape index: {}]
  %s5 = inlined_call_operand.hbm [shape: f32[32,32], index: 5, kind: input, shape index: {}]
  %s6 = inlined_call_operand.vmem [shape: f32[1,32], index: 6, kind: input, shape index: {}]
  %s7 = inlined_call_operand.hbm [shape: f32[2,8,32], index: 7, kind: output, shape index: {}]
  %s8 = sld [smem:[#allocation0]]
  $region62: #{tpu_custom_call.1} parent=0
    _
  %s10 = ssub.s32 1, %s8
  %s11 = scalar_select 0, %s10, %s8
  $region1: #{tpu_custom_call.1} parent=0
    #allocation2 [shape = 'u8[8192]{0}', space=vmem, size = 0x2000, scoped, tag = 'input window, operand 0, single buffered']
    #allocation3 [shape = 's32[1]{0}', space=sflag, size = 0x4, scoped, tag = 'scoped memory for tpu_custom_call.1']
    #allocation4 [shape = 's32[1]{0}', space=sflag, size = 0x4, scoped, tag = 'scoped memory for tpu_custom_call.1']
    #allocation5 [shape = 'u8[8192]{0}', space=vmem, size = 0x2000, scoped, tag = 'input window, operand 1, single buffered']
    #allocation6 [shape = 's32[1]{0}', space=sflag, size = 0x4, scoped, tag = 'scoped memory for tpu_custom_call.1']
    #allocation7 [shape = 'u8[16384]{0}', space=vmem, size = 0x4000, scoped, tag = 'input window, operand 2, single buffered']
    #allocation8 [shape = 'u8[8192]{0}', space=vmem, size = 0x2000, scoped, tag = 'input window, operand 3, single buffered']
    #allocation9 [shape = 's32[1]{0}', space=sflag, size = 0x4, scoped, tag = 'scoped memory for tpu_custom_call.1']
    #allocation10 [shape = 'u8[8192]{0}', space=vmem, size = 0x2000, scoped, tag = 'input window, operand 4, single buffered']
    #allocation11 [shape = 'u8[16384]{0}', space=vmem, size = 0x4000, scoped, tag = 'input window, operand 5, single buffered']
    #allocation12 [shape = 's32[1]{0}', space=sflag, size = 0x4, scoped, tag = 'scoped memory for tpu_custom_call.1']
    #allocation13 [shape = 'u8[8192]{0}', space=vmem, size = 0x2000, scoped, tag = 'output window, operand 0, single buffered']
    %12 = vsyncpa [#allocation3], 0
    %13 = vsyncpa [#allocation6], 0
    %14 = vsyncpa [#allocation9], 0
    %15 = vsyncpa [#allocation12], 0
    %16 = vsyncpa [#allocation4], 0
    // Predicated region
    $region2: #{tpu_custom_call.1} parent=1 // pred_check
      _
    $region3: #{tpu_custom_call.1} parent=1 // pred_check_branch
      %18 = sbr.rel (0) target = $region5
    $region4: #{tpu_custom_call.1} parent=1 // pred_region
      %s20 = ssub.s32 256, 256
      %21 = vsyncadd [#allocation3], %s20
      %s22 = sshll.u32 [#allocation2], 4
      %s23 = int_to_ptr.vmem [resolvable:$true] %s22
      %28 = dma.hbm_to_vmem [thread:$0]  %s0, 256, %s23, [#allocation3], 128, 128, 8
    $region5: #{tpu_custom_call.1} parent=1 // pred_fallthru
      _
    // Predicated region
    $region6: #{tpu_custom_call.1} parent=1 // pred_check
      _
    $region7: #{tpu_custom_call.1} parent=1 // pred_check_branch
      %30 = sbr.rel (0) target = $region9
    $region8: #{tpu_custom_call.1} parent=1 // pred_region
      %s32 = ssub.s32 256, 256
      %33 = vsyncadd [#allocation6], %s32
      %s34 = sshll.u32 [#allocation5], 4
      %s35 = int_to_ptr.vmem [resolvable:$true] %s34
      %40 = dma.hbm_to_vmem [thread:$0]  %s1, 256, %s35, [#allocation6], 128, 128, 8
    $region9: #{tpu_custom_call.1} parent=1 // pred_fallthru
      _
    // Predicated region
    $region10: #{tpu_custom_call.1} parent=1 // pred_check
      _
    $region11: #{tpu_custom_call.1} parent=1 // pred_check_branch
      %42 = sbr.rel (0) target = $region13
    $region12: #{tpu_custom_call.1} parent=1 // pred_region
      %s44 = ssub.s32 512, 512
      %45 = vsyncadd [#allocation6], %s44
      %s46 = sshll.u32 [#allocation7], 4
      %s47 = int_to_ptr.vmem [resolvable:$true] %s46
      %52 = dma.hbm_to_vmem [thread:$0]  %s2, 512, %s47, [#allocation6], 128, 128, 8
    $region13: #{tpu_custom_call.1} parent=1 // pred_fallthru
      _
    // Predicated region
    $region14: #{tpu_custom_call.1} parent=1 // pred_check
      _
    $region15: #{tpu_custom_call.1} parent=1 // pred_check_branch
      %54 = sbr.rel (0) target = $region17
    $region16: #{tpu_custom_call.1} parent=1 // pred_region
      %s56 = ssub.s32 256, 256
      %57 = vsyncadd [#allocation9], %s56
      %s58 = sshll.u32 [#allocation8], 4
      %s59 = int_to_ptr.vmem [resolvable:$true] %s58
      %64 = dma.hbm_to_vmem [thread:$0]  %s3, 256, %s59, [#allocation9], 128, 128, 8
    $region17: #{tpu_custom_call.1} parent=1 // pred_fallthru
      _
    // Predicated region
    $region18: #{tpu_custom_call.1} parent=1 // pred_check
      _
    $region19: #{tpu_custom_call.1} parent=1 // pred_check_branch
      %66 = sbr.rel (0) target = $region21
    $region20: #{tpu_custom_call.1} parent=1 // pred_region
      %s68 = ssub.s32 256, 256
      %69 = vsyncadd [#allocation9], %s68
      %s70 = sshll.u32 [#allocation10], 4
      %s71 = int_to_ptr.vmem [resolvable:$true] %s70
      %76 = dma.hbm_to_vmem [thread:$0]  %s4, 256, %s71, [#allocation9], 128, 128, 8
    $region21: #{tpu_custom_call.1} parent=1 // pred_fallthru
      _
    // Predicated region
    $region22: #{tpu_custom_call.1} parent=1 // pred_check
      _
    $region23: #{tpu_custom_call.1} parent=1 // pred_check_branch
      %78 = sbr.rel (0) target = $region25
    $region24: #{tpu_custom_call.1} parent=1 // pred_region
      %s80 = ssub.s32 512, 512
      %81 = vsyncadd [#allocation12], %s80
      %s82 = sshll.u32 [#allocation11], 4
      %s83 = int_to_ptr.vmem [resolvable:$true] %s82
      %88 = dma.hbm_to_vmem [thread:$0]  %s5, 512, %s83, [#allocation12], 128, 128, 8
    $region25: #{tpu_custom_call.1} parent=1 // pred_fallthru
      _
    // Predicated region
    $region26: #{tpu_custom_call.1} parent=1 // pred_check
      _
    $region27: #{tpu_custom_call.1} parent=1 // pred_check_branch
      %90 = sbr.rel (0) target = $region29
    $region28: #{tpu_custom_call.1} parent=1 // pred_region
      _
    $region29: #{tpu_custom_call.1} parent=1 // pred_fallthru
      _
    // Predicated region
    $region30: #{tpu_custom_call.1} parent=1 // pred_check
      _
    $region31: #{tpu_custom_call.1} parent=1 // pred_check_branch
      %92 = sbr.rel (0) target = $region33
    $region32: #{tpu_custom_call.1} parent=1 // pred_region
      %93 = dma.done [#allocation3], 256
    $region33: #{tpu_custom_call.1} parent=1 // pred_fallthru
      _
    // Predicated region
    $region34: #{tpu_custom_call.1} parent=1 // pred_check
      _
    $region35: #{tpu_custom_call.1} parent=1 // pred_check_branch
      %95 = sbr.rel (0) target = $region37
    $region36: #{tpu_custom_call.1} parent=1 // pred_region
      %96 = dma.done [#allocation6], 256
    $region37: #{tpu_custom_call.1} parent=1 // pred_fallthru
      _
    // Predicated region
    $region38: #{tpu_custom_call.1} parent=1 // pred_check
      _
    $region39: #{tpu_custom_call.1} parent=1 // pred_check_branch
      %98 = sbr.rel (0) target = $region41
    $region40: #{tpu_custom_call.1} parent=1 // pred_region
      %99 = dma.done [#allocation6], 512
    $region41: #{tpu_custom_call.1} parent=1 // pred_fallthru
      _
    // Predicated region
    $region42: #{tpu_custom_call.1} parent=1 // pred_check
      _
    $region43: #{tpu_custom_call.1} parent=1 // pred_check_branch
      %101 = sbr.rel (0) target = $region45
    $region44: #{tpu_custom_call.1} parent=1 // pred_region
      %102 = dma.done [#allocation9], 256
    $region45: #{tpu_custom_call.1} parent=1 // pred_fallthru
      _
    // Predicated region
    $region46: #{tpu_custom_call.1} parent=1 // pred_check
      _
    $region47: #{tpu_custom_call.1} parent=1 // pred_check_branch
      %104 = sbr.rel (0) target = $region49
    $region48: #{tpu_custom_call.1} parent=1 // pred_region
      %105 = dma.done [#allocation9], 256
    $region49: #{tpu_custom_call.1} parent=1 // pred_fallthru
      _
    // Predicated region
    $region50: #{tpu_custom_call.1} parent=1 // pred_check
      _
    $region51: #{tpu_custom_call.1} parent=1 // pred_check_branch
      %107 = sbr.rel (0) target = $region53
    $region52: #{tpu_custom_call.1} parent=1 // pred_region
      %108 = dma.done [#allocation12], 512
    $region53: #{tpu_custom_call.1} parent=1 // pred_fallthru
      _
    %v109 = vld [vmem:[#allocation2] sm:$0xff]
    %v110 = vld [vmem:[#allocation2 + $0x8] sm:$0xff]
    %v111 = vld [vmem:[#allocation5] sm:$0xff]
    %v112 = vld [vmem:[#allocation5 + $0x8] sm:$0xff]
    %v113 = vld [vmem:[#allocation7] sm:$0xff]
    %v114 = vld [vmem:[#allocation7 + $0x8] sm:$0xff]
    %v115 = vld [vmem:[#allocation7 + $0x10] sm:$0xff]
    %v116 = vld [vmem:[#allocation7 + $0x18] sm:$0xff]
    %vm117 = vcmask 261120
    %v119 = vsel %vm117, %v109, 0
    %v122 = vsel %vm117, %v110, 0
    %124 = vmatprep.subr.mxu0 0.0
    %125 = vmatpush1.msra.mxu0 0.0
    %126 = vmatprep.subr.mxu0 0.0
    %127 = vmatpush1.msra.mxu0 0.0
    %128 = vmatprep.subr.mxu0 0.0
    %129 = vmatpush1.msra.mxu0 0.0
    %130 = vmatprep.subr.mxu0 0.0
    %131 = vmatpush1.msra.mxu0 0.0
    %132 = vmatprep.subr.mxu0 0.0
    %133 = vmatpush1.msra.mxu0 0.0
    %134 = vmatprep.subr.mxu0 0.0
    %135 = vmatpush1.msra.mxu0 0.0
    %136 = vmatprep.subr.mxu0 0.0
    %137 = vmatpush1.msra.mxu0 0.0
    %138 = vmatprep.subr.mxu0 0.0
    %139 = vmatpush1.msra.mxu0 0.0
    %140 = vmatprep.subr.mxu0 0.0
    %141 = vmatpush1.msra.mxu0 0.0
    %142 = vmatprep.subr.mxu0 0.0
    %143 = vmatpush1.msra.mxu0 0.0
    %144 = vmatprep.subr.mxu0 0.0
    %145 = vmatpush1.msra.mxu0 0.0
    %146 = vmatprep.subr.mxu0 0.0
    %147 = vmatpush1.msra.mxu0 0.0
    %148 = vmatprep.subr.mxu0 0.0
    %149 = vmatpush1.msra.mxu0 %v116
    %150 = vmatprep.subr.mxu0 0.0
    %151 = vmatpush1.msra.mxu0 %v115
    %152 = vmatprep.subr.mxu0 0.0
    %153 = vmatpush1.msra.mxu0 %v114
    %154 = vmatprep.subr.mxu0 0.0
    %155 = vmatpush1.msra.mxu0 %v113
    %156 = vmatprep.subr.mxu0 0.0
    %157 = vmatpush2.msra.mxu0 0.0
    %158 = vmatprep.subr.mxu0 0.0
    %159 = vmatpush2.msra.mxu0 0.0
    %160 = vmatprep.subr.mxu0 0.0
    %161 = vmatpush2.msra.mxu0 0.0
    %162 = vmatprep.subr.mxu0 0.0
    %163 = vmatpush2.msra.mxu0 0.0
    %164 = vmatprep.subr.mxu0 0.0
    %165 = vmatpush2.msra.mxu0 0.0
    %166 = vmatprep.subr.mxu0 0.0
    %167 = vmatpush2.msra.mxu0 0.0
    %168 = vmatprep.subr.mxu0 0.0
    %169 = vmatpush2.msra.mxu0 0.0
    %170 = vmatprep.subr.mxu0 0.0
    %171 = vmatpush2.msra.mxu0 0.0
    %172 = vmatprep.subr.mxu0 0.0
    %173 = vmatpush2.msra.mxu0 0.0
    %174 = vmatprep.subr.mxu0 0.0
    %175 = vmatpush2.msra.mxu0 0.0
    %176 = vmatprep.subr.mxu0 0.0
    %177 = vmatpush2.msra.mxu0 0.0
    %178 = vmatprep.subr.mxu0 0.0
    %179 = vmatpush2.msra.mxu0 0.0
    %180 = vmatprep.subr.mxu0 0.0
    %181 = vmatpush2.msra.mxu0 0.0
    %182 = vmatprep.subr.mxu0 0.0
    %183 = vmatpush2.msra.mxu0 0.0
    %184 = vmatprep.subr.mxu0 0.0
    %185 = vmatpush2.msra.mxu0 0.0
    %186 = vmatprep.subr.mxu0 0.0
    %187 = vmatpush2.msra.mxu0 0.0
    %188 = vmatprep.mubr.f32.mxu0 0.0
    %189 = vmatmul.mubr.f32.gmra.mxu0 %v119
    %v190 = vpop.f32.mrf.mxu0
    %v191 = vadd.f32 0.0, %v190
    %v192 = vpop.f32.mrf.mxu0
    %193 = vmatprep.mubr.f32.mxu0 0.0
    %194 = vmatmul.mubr.f32.gmra.mxu0 %v122
    %v195 = vpop.f32.mrf.mxu0
    %v196 = vadd.f32 0.0, %v195
    %v197 = vpop.f32.mrf.mxu0
    %198 = vdwg.mxu0
    %v199 = vmul.f32 %v191, 0.35355338
    %v200 = vmul.f32 %v196, 0.35355338
    %v201 = vld [vmem:[#allocation8] sm:$0xff]
    %v202 = vld [vmem:[#allocation8 + $0x8] sm:$0xff]
    %vm203 = vcmask 130048
    %v205 = vsel %vm203, %v111, 0
    %v208 = vsel %vm203, %v112, 0
    %210 = vmatprep.subr.mxu0 0.0
    %211 = vmatpush1.msra.mxu0 0.0
    %212 = vmatprep.subr.mxu0 0.0
    %213 = vmatpush1.msra.mxu0 0.0
    %214 = vmatprep.subr.mxu0 0.0
    %215 = vmatpush1.msra.mxu0 0.0
    %216 = vmatprep.subr.mxu0 0.0
    %217 = vmatpush1.msra.mxu0 0.0
    %218 = vmatprep.subr.mxu0 0.0
    %219 = vmatpush1.msra.mxu0 0.0
    %220 = vmatprep.subr.mxu0 0.0
    %221 = vmatpush1.msra.mxu0 0.0
    %222 = vmatprep.subr.mxu0 0.0
    %223 = vmatpush1.msra.mxu0 0.0
    %224 = vmatprep.subr.mxu0 0.0
    %225 = vmatpush1.msra.mxu0 0.0
    %226 = vmatprep.subr.mxu0 0.0
    %227 = vmatpush1.msra.mxu0 0.0
    %228 = vmatprep.subr.mxu0 0.0
    %229 = vmatpush1.msra.mxu0 0.0
    %230 = vmatprep.subr.mxu0 0.0
    %231 = vmatpush1.msra.mxu0 0.0
    %232 = vmatprep.subr.mxu0 0.0
    %233 = vmatpush1.msra.mxu0 0.0
    %234 = vmatprep.subr.mxu0 0.0
    %235 = vmatpush1.msra.mxu0 0.0
    %236 = vmatprep.subr.mxu0 0.0
    %237 = vmatpush1.msra.mxu0 0.0
    %238 = vmatprep.subr.mxu0 0.0
    %239 = vmatpush1.msra.mxu0 %v202
    %240 = vmatprep.subr.mxu0 0.0
    %241 = vmatpush1.msra.mxu0 %v201
    %242 = vmatprep.subr.mxu0 0.0
    %243 = vmatpush2.msra.mxu0 0.0
    %244 = vmatprep.subr.mxu0 0.0
    %245 = vmatpush2.msra.mxu0 0.0
    %246 = vmatprep.subr.mxu0 0.0
    %247 = vmatpush2.msra.mxu0 0.0
    %248 = vmatprep.subr.mxu0 0.0
    %249 = vmatpush2.msra.mxu0 0.0
    %250 = vmatprep.subr.mxu0 0.0
    %251 = vmatpush2.msra.mxu0 0.0
    %252 = vmatprep.subr.mxu0 0.0
    %253 = vmatpush2.msra.mxu0 0.0
    %254 = vmatprep.subr.mxu0 0.0
    %255 = vmatpush2.msra.mxu0 0.0
    %256 = vmatprep.subr.mxu0 0.0
    %257 = vmatpush2.msra.mxu0 0.0
    %258 = vmatprep.subr.mxu0 0.0
    %259 = vmatpush2.msra.mxu0 0.0
    %260 = vmatprep.subr.mxu0 0.0
    %261 = vmatpush2.msra.mxu0 0.0
    %262 = vmatprep.subr.mxu0 0.0
    %263 = vmatpush2.msra.mxu0 0.0
    %264 = vmatprep.subr.mxu0 0.0
    %265 = vmatpush2.msra.mxu0 0.0
    %266 = vmatprep.subr.mxu0 0.0
    %267 = vmatpush2.msra.mxu0 0.0
    %268 = vmatprep.subr.mxu0 0.0
    %269 = vmatpush2.msra.mxu0 0.0
    %270 = vmatprep.subr.mxu0 0.0
    %271 = vmatpush2.msra.mxu0 0.0
    %272 = vmatprep.subr.mxu0 0.0
    %273 = vmatpush2.msra.mxu0 0.0
    %274 = vmatprep.mubr.f32.mxu0 0.0
    %275 = vmatmul.mubr.f32.gmra.mxu0 %v205
    %v276 = vpop.f32.mrf.mxu0
    %v277 = vadd.f32 0.0, %v276
    %v278 = vpop.f32.mrf.mxu0
    %279 = vmatprep.mubr.f32.mxu0 0.0
    %280 = vmatmul.mubr.f32.gmra.mxu0 %v208
    %v281 = vpop.f32.mrf.mxu0
    %v282 = vadd.f32 0.0, %v281
    %v283 = vpop.f32.mrf.mxu0
    %284 = vdwg.mxu0
    %v285 = vld [vmem:[#allocation10] sm:$0xff]
    %v286 = vld [vmem:[#allocation10 + $0x8] sm:$0xff]
    %287 = vmatprep.subr.mxu0 0.0
    %288 = vmatpush1.msra.mxu0 0.0
    %289 = vmatprep.subr.mxu0 0.0
    %290 = vmatpush1.msra.mxu0 0.0
    %291 = vmatprep.subr.mxu0 0.0
    %292 = vmatpush1.msra.mxu0 0.0
    %293 = vmatprep.subr.mxu0 0.0
    %294 = vmatpush1.msra.mxu0 0.0
    %295 = vmatprep.subr.mxu0 0.0
    %296 = vmatpush1.msra.mxu0 0.0
    %297 = vmatprep.subr.mxu0 0.0
    %298 = vmatpush1.msra.mxu0 0.0
    %299 = vmatprep.subr.mxu0 0.0
    %300 = vmatpush1.msra.mxu0 0.0
    %301 = vmatprep.subr.mxu0 0.0
    %302 = vmatpush1.msra.mxu0 0.0
    %303 = vmatprep.subr.mxu0 0.0
    %304 = vmatpush1.msra.mxu0 0.0
    %305 = vmatprep.subr.mxu0 0.0
    %306 = vmatpush1.msra.mxu0 0.0
    %307 = vmatprep.subr.mxu0 0.0
    %308 = vmatpush1.msra.mxu0 0.0
    %309 = vmatprep.subr.mxu0 0.0
    %310 = vmatpush1.msra.mxu0 0.0
    %311 = vmatprep.subr.mxu0 0.0
    %312 = vmatpush1.msra.mxu0 0.0
    %313 = vmatprep.subr.mxu0 0.0
    %314 = vmatpush1.msra.mxu0 0.0
    %315 = vmatprep.subr.mxu0 0.0
    %316 = vmatpush1.msra.mxu0 %v286
    %317 = vmatprep.subr.mxu0 0.0
    %318 = vmatpush1.msra.mxu0 %v285
    %319 = vmatprep.subr.mxu0 0.0
    %320 = vmatpush2.msra.mxu0 0.0
    %321 = vmatprep.subr.mxu0 0.0
    %322 = vmatpush2.msra.mxu0 0.0
    %323 = vmatprep.subr.mxu0 0.0
    %324 = vmatpush2.msra.mxu0 0.0
    %325 = vmatprep.subr.mxu0 0.0
    %326 = vmatpush2.msra.mxu0 0.0
    %327 = vmatprep.subr.mxu0 0.0
    %328 = vmatpush2.msra.mxu0 0.0
    %329 = vmatprep.subr.mxu0 0.0
    %330 = vmatpush2.msra.mxu0 0.0
    %331 = vmatprep.subr.mxu0 0.0
    %332 = vmatpush2.msra.mxu0 0.0
    %333 = vmatprep.subr.mxu0 0.0
    %334 = vmatpush2.msra.mxu0 0.0
    %335 = vmatprep.subr.mxu0 0.0
    %336 = vmatpush2.msra.mxu0 0.0
    %337 = vmatprep.subr.mxu0 0.0
    %338 = vmatpush2.msra.mxu0 0.0
    %339 = vmatprep.subr.mxu0 0.0
    %340 = vmatpush2.msra.mxu0 0.0
    %341 = vmatprep.subr.mxu0 0.0
    %342 = vmatpush2.msra.mxu0 0.0
    %343 = vmatprep.subr.mxu0 0.0
    %344 = vmatpush2.msra.mxu0 0.0
    %345 = vmatprep.subr.mxu0 0.0
    %346 = vmatpush2.msra.mxu0 0.0
    %347 = vmatprep.subr.mxu0 0.0
    %348 = vmatpush2.msra.mxu0 0.0
    %349 = vmatprep.subr.mxu0 0.0
    %350 = vmatpush2.msra.mxu0 0.0
    %351 = vmatprep.mubr.f32.mxu0 0.0
    %352 = vmatmul.mubr.f32.gmra.mxu0 %v205
    %v353 = vpop.f32.mrf.mxu0
    %v354 = vadd.f32 0.0, %v353
    %v355 = vpop.f32.mrf.mxu0
    %356 = vmatprep.mubr.f32.mxu0 0.0
    %357 = vmatmul.mubr.f32.gmra.mxu0 %v208
    %v358 = vpop.f32.mrf.mxu0
    %v359 = vadd.f32 0.0, %v358
    %v360 = vpop.f32.mrf.mxu0
    %361 = vdwg.mxu0
    %364 = vrot.lane.b32.xlu0 %v199, 120
    %v365 = vpop.permute.xlu0 %364
    %366 = vrot.lane.b32.xlu0 %v200, 120
    %v367 = vpop.permute.xlu0 %366
    %368 = vrot.lane.b32.xlu0 %v199, 112
    %v369 = vpop.permute.xlu0 %368
    %370 = vrot.lane.b32.xlu0 %v200, 112
    %v371 = vpop.permute.xlu0 %370
    %372 = vrot.lane.b32.xlu0 %v199, 104
    %v373 = vpop.permute.xlu0 %372
    %374 = vrot.lane.b32.xlu0 %v200, 104
    %v375 = vpop.permute.xlu0 %374
    %378 = vrot.lane.b32.xlu0 %v277, 120
    %v379 = vpop.permute.xlu0 %378
    %380 = vrot.lane.b32.xlu0 %v282, 120
    %v381 = vpop.permute.xlu0 %380
    %382 = vrot.lane.b32.xlu0 %v277, 112
    %v383 = vpop.permute.xlu0 %382
    %384 = vrot.lane.b32.xlu0 %v282, 112
    %v385 = vpop.permute.xlu0 %384
    %386 = vrot.lane.b32.xlu0 %v277, 104
    %v387 = vpop.permute.xlu0 %386
    %388 = vrot.lane.b32.xlu0 %v282, 104
    %v389 = vpop.permute.xlu0 %388
    %392 = vrot.lane.b32.xlu0 %v354, 120
    %v393 = vpop.permute.xlu0 %392
    %394 = vrot.lane.b32.xlu0 %v359, 120
    %v395 = vpop.permute.xlu0 %394
    %398 = vrot.lane.b32.xlu0 %v354, 112
    %v399 = vpop.permute.xlu0 %398
    %400 = vrot.lane.b32.xlu0 %v359, 112
    %v401 = vpop.permute.xlu0 %400
    %404 = vrot.lane.b32.xlu0 %v354, 104
    %v405 = vpop.permute.xlu0 %404
    %406 = vrot.lane.b32.xlu0 %v359, 104
    %v407 = vpop.permute.xlu0 %406
    %vm410 = vcmask 64512
    %v411 = vsel %vm410, %v199, 0
    %v413 = vsel %vm410, %v277, 0
    %415 = vmatprep.subr.mxu0 0.0
    %416 = vmatpush1.xpose.msra.mxu0 0.0
    %417 = vmatprep.subr.mxu0 0.0
    %418 = vmatpush1.xpose.msra.mxu0 0.0
    %419 = vmatprep.subr.mxu0 0.0
    %420 = vmatpush1.xpose.msra.mxu0 0.0
    %421 = vmatprep.subr.mxu0 0.0
    %422 = vmatpush1.xpose.msra.mxu0 0.0
    %423 = vmatprep.subr.mxu0 0.0
    %424 = vmatpush1.xpose.msra.mxu0 0.0
    %425 = vmatprep.subr.mxu0 0.0
    %426 = vmatpush1.xpose.msra.mxu0 0.0
    %427 = vmatprep.subr.mxu0 0.0
    %428 = vmatpush1.xpose.msra.mxu0 0.0
    %429 = vmatprep.subr.mxu0 0.0
    %430 = vmatpush1.xpose.msra.mxu0 0.0
    %431 = vmatprep.subr.mxu0 0.0
    %432 = vmatpush1.xpose.msra.mxu0 0.0
    %433 = vmatprep.subr.mxu0 0.0
    %434 = vmatpush1.xpose.msra.mxu0 0.0
    %435 = vmatprep.subr.mxu0 0.0
    %436 = vmatpush1.xpose.msra.mxu0 0.0
    %437 = vmatprep.subr.mxu0 0.0
    %438 = vmatpush1.xpose.msra.mxu0 0.0
    %439 = vmatprep.subr.mxu0 0.0
    %440 = vmatpush1.xpose.msra.mxu0 0.0
    %441 = vmatprep.subr.mxu0 0.0
    %442 = vmatpush1.xpose.msra.mxu0 0.0
    %443 = vmatprep.subr.mxu0 0.0
    %444 = vmatpush1.xpose.msra.mxu0 0.0
    %445 = vmatprep.subr.mxu0 0.0
    %446 = vmatpush1.xpose.msra.mxu0 %v413
    %447 = vmatprep.subr.mxu0 0.0
    %448 = vmatpush2.xpose.msra.mxu0 0.0
    %449 = vmatprep.subr.mxu0 0.0
    %450 = vmatpush2.xpose.msra.mxu0 0.0
    %451 = vmatprep.subr.mxu0 0.0
    %452 = vmatpush2.xpose.msra.mxu0 0.0
    %453 = vmatprep.subr.mxu0 0.0
    %454 = vmatpush2.xpose.msra.mxu0 0.0
    %455 = vmatprep.subr.mxu0 0.0
    %456 = vmatpush2.xpose.msra.mxu0 0.0
    %457 = vmatprep.subr.mxu0 0.0
    %458 = vmatpush2.xpose.msra.mxu0 0.0
    %459 = vmatprep.subr.mxu0 0.0
    %460 = vmatpush2.xpose.msra.mxu0 0.0
    %461 = vmatprep.subr.mxu0 0.0
    %462 = vmatpush2.xpose.msra.mxu0 0.0
    %463 = vmatprep.subr.mxu0 0.0
    %464 = vmatpush2.xpose.msra.mxu0 0.0
    %465 = vmatprep.subr.mxu0 0.0
    %466 = vmatpush2.xpose.msra.mxu0 0.0
    %467 = vmatprep.subr.mxu0 0.0
    %468 = vmatpush2.xpose.msra.mxu0 0.0
    %469 = vmatprep.subr.mxu0 0.0
    %470 = vmatpush2.xpose.msra.mxu0 0.0
    %471 = vmatprep.subr.mxu0 0.0
    %472 = vmatpush2.xpose.msra.mxu0 0.0
    %473 = vmatprep.subr.mxu0 0.0
    %474 = vmatpush2.xpose.msra.mxu0 0.0
    %475 = vmatprep.subr.mxu0 0.0
    %476 = vmatpush2.xpose.msra.mxu0 0.0
    %477 = vmatprep.subr.mxu0 0.0
    %478 = vmatpush2.xpose.msra.mxu0 0.0
    %479 = vmatprep.mubr.f32.mxu0 0.0
    %480 = vmatmul.mubr.f32.gmra.mxu0 %v411
    %v481 = vpop.f32.mrf.mxu0
    %v482 = vadd.f32 0.0, %v481
    %v483 = vpop.f32.mrf.mxu0
    %484 = vdwg.mxu0
    %v485 = vsel %vm410, %v365, 0
    %v487 = vsel %vm410, %v379, 0
    %489 = vmatprep.subr.mxu0 0.0
    %490 = vmatpush1.xpose.msra.mxu0 0.0
    %491 = vmatprep.subr.mxu0 0.0
    %492 = vmatpush1.xpose.msra.mxu0 0.0
    %493 = vmatprep.subr.mxu0 0.0
    %494 = vmatpush1.xpose.msra.mxu0 0.0
    %495 = vmatprep.subr.mxu0 0.0
    %496 = vmatpush1.xpose.msra.mxu0 0.0
    %497 = vmatprep.subr.mxu0 0.0
    %498 = vmatpush1.xpose.msra.mxu0 0.0
    %499 = vmatprep.subr.mxu0 0.0
    %500 = vmatpush1.xpose.msra.mxu0 0.0
    %501 = vmatprep.subr.mxu0 0.0
    %502 = vmatpush1.xpose.msra.mxu0 0.0
    %503 = vmatprep.subr.mxu0 0.0
    %504 = vmatpush1.xpose.msra.mxu0 0.0
    %505 = vmatprep.subr.mxu0 0.0
    %506 = vmatpush1.xpose.msra.mxu0 0.0
    %507 = vmatprep.subr.mxu0 0.0
    %508 = vmatpush1.xpose.msra.mxu0 0.0
    %509 = vmatprep.subr.mxu0 0.0
    %510 = vmatpush1.xpose.msra.mxu0 0.0
    %511 = vmatprep.subr.mxu0 0.0
    %512 = vmatpush1.xpose.msra.mxu0 0.0
    %513 = vmatprep.subr.mxu0 0.0
    %514 = vmatpush1.xpose.msra.mxu0 0.0
    %515 = vmatprep.subr.mxu0 0.0
    %516 = vmatpush1.xpose.msra.mxu0 0.0
    %517 = vmatprep.subr.mxu0 0.0
    %518 = vmatpush1.xpose.msra.mxu0 0.0
    %519 = vmatprep.subr.mxu0 0.0
    %520 = vmatpush1.xpose.msra.mxu0 %v487
    %521 = vmatprep.subr.mxu0 0.0
    %522 = vmatpush2.xpose.msra.mxu0 0.0
    %523 = vmatprep.subr.mxu0 0.0
    %524 = vmatpush2.xpose.msra.mxu0 0.0
    %525 = vmatprep.subr.mxu0 0.0
    %526 = vmatpush2.xpose.msra.mxu0 0.0
    %527 = vmatprep.subr.mxu0 0.0
    %528 = vmatpush2.xpose.msra.mxu0 0.0
    %529 = vmatprep.subr.mxu0 0.0
    %530 = vmatpush2.xpose.msra.mxu0 0.0
    %531 = vmatprep.subr.mxu0 0.0
    %532 = vmatpush2.xpose.msra.mxu0 0.0
    %533 = vmatprep.subr.mxu0 0.0
    %534 = vmatpush2.xpose.msra.mxu0 0.0
    %535 = vmatprep.subr.mxu0 0.0
    %536 = vmatpush2.xpose.msra.mxu0 0.0
    %537 = vmatprep.subr.mxu0 0.0
    %538 = vmatpush2.xpose.msra.mxu0 0.0
    %539 = vmatprep.subr.mxu0 0.0
    %540 = vmatpush2.xpose.msra.mxu0 0.0
    %541 = vmatprep.subr.mxu0 0.0
    %542 = vmatpush2.xpose.msra.mxu0 0.0
    %543 = vmatprep.subr.mxu0 0.0
    %544 = vmatpush2.xpose.msra.mxu0 0.0
    %545 = vmatprep.subr.mxu0 0.0
    %546 = vmatpush2.xpose.msra.mxu0 0.0
    %547 = vmatprep.subr.mxu0 0.0
    %548 = vmatpush2.xpose.msra.mxu0 0.0
    %549 = vmatprep.subr.mxu0 0.0
    %550 = vmatpush2.xpose.msra.mxu0 0.0
    %551 = vmatprep.subr.mxu0 0.0
    %552 = vmatpush2.xpose.msra.mxu0 0.0
    %553 = vmatprep.mubr.f32.mxu0 0.0
    %554 = vmatmul.mubr.f32.gmra.mxu0 %v485
    %v555 = vpop.f32.mrf.mxu0
    %v556 = vadd.f32 0.0, %v555
    %v557 = vpop.f32.mrf.mxu0
    %558 = vdwg.mxu0
    %v559 = vsel %vm410, %v369, 0
    %v561 = vsel %vm410, %v383, 0
    %563 = vmatprep.subr.mxu0 0.0
    %564 = vmatpush1.xpose.msra.mxu0 0.0
    %565 = vmatprep.subr.mxu0 0.0
    %566 = vmatpush1.xpose.msra.mxu0 0.0
    %567 = vmatprep.subr.mxu0 0.0
    %568 = vmatpush1.xpose.msra.mxu0 0.0
    %569 = vmatprep.subr.mxu0 0.0
    %570 = vmatpush1.xpose.msra.mxu0 0.0
    %571 = vmatprep.subr.mxu0 0.0
    %572 = vmatpush1.xpose.msra.mxu0 0.0
    %573 = vmatprep.subr.mxu0 0.0
    %574 = vmatpush1.xpose.msra.mxu0 0.0
    %575 = vmatprep.subr.mxu0 0.0
    %576 = vmatpush1.xpose.msra.mxu0 0.0
    %577 = vmatprep.subr.mxu0 0.0
    %578 = vmatpush1.xpose.msra.mxu0 0.0
    %579 = vmatprep.subr.mxu0 0.0
    %580 = vmatpush1.xpose.msra.mxu0 0.0
    %581 = vmatprep.subr.mxu0 0.0
    %582 = vmatpush1.xpose.msra.mxu0 0.0
    %583 = vmatprep.subr.mxu0 0.0
    %584 = vmatpush1.xpose.msra.mxu0 0.0
    %585 = vmatprep.subr.mxu0 0.0
    %586 = vmatpush1.xpose.msra.mxu0 0.0
    %587 = vmatprep.subr.mxu0 0.0
    %588 = vmatpush1.xpose.msra.mxu0 0.0
    %589 = vmatprep.subr.mxu0 0.0
    %590 = vmatpush1.xpose.msra.mxu0 0.0
    %591 = vmatprep.subr.mxu0 0.0
    %592 = vmatpush1.xpose.msra.mxu0 0.0
    %593 = vmatprep.subr.mxu0 0.0
    %594 = vmatpush1.xpose.msra.mxu0 %v561
    %595 = vmatprep.subr.mxu0 0.0
    %596 = vmatpush2.xpose.msra.mxu0 0.0
    %597 = vmatprep.subr.mxu0 0.0
    %598 = vmatpush2.xpose.msra.mxu0 0.0
    %599 = vmatprep.subr.mxu0 0.0
    %600 = vmatpush2.xpose.msra.mxu0 0.0
    %601 = vmatprep.subr.mxu0 0.0
    %602 = vmatpush2.xpose.msra.mxu0 0.0
    %603 = vmatprep.subr.mxu0 0.0
    %604 = vmatpush2.xpose.msra.mxu0 0.0
    %605 = vmatprep.subr.mxu0 0.0
    %606 = vmatpush2.xpose.msra.mxu0 0.0
    %607 = vmatprep.subr.mxu0 0.0
    %608 = vmatpush2.xpose.msra.mxu0 0.0
    %609 = vmatprep.subr.mxu0 0.0
    %610 = vmatpush2.xpose.msra.mxu0 0.0
    %611 = vmatprep.subr.mxu0 0.0
    %612 = vmatpush2.xpose.msra.mxu0 0.0
    %613 = vmatprep.subr.mxu0 0.0
    %614 = vmatpush2.xpose.msra.mxu0 0.0
    %615 = vmatprep.subr.mxu0 0.0
    %616 = vmatpush2.xpose.msra.mxu0 0.0
    %617 = vmatprep.subr.mxu0 0.0
    %618 = vmatpush2.xpose.msra.mxu0 0.0
    %619 = vmatprep.subr.mxu0 0.0
    %620 = vmatpush2.xpose.msra.mxu0 0.0
    %621 = vmatprep.subr.mxu0 0.0
    %622 = vmatpush2.xpose.msra.mxu0 0.0
    %623 = vmatprep.subr.mxu0 0.0
    %624 = vmatpush2.xpose.msra.mxu0 0.0
    %625 = vmatprep.subr.mxu0 0.0
    %626 = vmatpush2.xpose.msra.mxu0 0.0
    %627 = vmatprep.mubr.f32.mxu0 0.0
    %628 = vmatmul.mubr.f32.gmra.mxu0 %v559
    %v629 = vpop.f32.mrf.mxu0
    %v630 = vadd.f32 0.0, %v629
    %v631 = vpop.f32.mrf.mxu0
    %632 = vdwg.mxu0
    %v633 = vsel %vm410, %v373, 0
    %v635 = vsel %vm410, %v387, 0
    %637 = vmatprep.subr.mxu0 0.0
    %638 = vmatpush1.xpose.msra.mxu0 0.0
    %639 = vmatprep.subr.mxu0 0.0
    %640 = vmatpush1.xpose.msra.mxu0 0.0
    %641 = vmatprep.subr.mxu0 0.0
    %642 = vmatpush1.xpose.msra.mxu0 0.0
    %643 = vmatprep.subr.mxu0 0.0
    %644 = vmatpush1.xpose.msra.mxu0 0.0
    %645 = vmatprep.subr.mxu0 0.0
    %646 = vmatpush1.xpose.msra.mxu0 0.0
    %647 = vmatprep.subr.mxu0 0.0
    %648 = vmatpush1.xpose.msra.mxu0 0.0
    %649 = vmatprep.subr.mxu0 0.0
    %650 = vmatpush1.xpose.msra.mxu0 0.0
    %651 = vmatprep.subr.mxu0 0.0
    %652 = vmatpush1.xpose.msra.mxu0 0.0
    %653 = vmatprep.subr.mxu0 0.0
    %654 = vmatpush1.xpose.msra.mxu0 0.0
    %655 = vmatprep.subr.mxu0 0.0
    %656 = vmatpush1.xpose.msra.mxu0 0.0
    %657 = vmatprep.subr.mxu0 0.0
    %658 = vmatpush1.xpose.msra.mxu0 0.0
    %659 = vmatprep.subr.mxu0 0.0
    %660 = vmatpush1.xpose.msra.mxu0 0.0
    %661 = vmatprep.subr.mxu0 0.0
    %662 = vmatpush1.xpose.msra.mxu0 0.0
    %663 = vmatprep.subr.mxu0 0.0
    %664 = vmatpush1.xpose.msra.mxu0 0.0
    %665 = vmatprep.subr.mxu0 0.0
    %666 = vmatpush1.xpose.msra.mxu0 0.0
    %667 = vmatprep.subr.mxu0 0.0
    %668 = vmatpush1.xpose.msra.mxu0 %v635
    %669 = vmatprep.subr.mxu0 0.0
    %670 = vmatpush2.xpose.msra.mxu0 0.0
    %671 = vmatprep.subr.mxu0 0.0
    %672 = vmatpush2.xpose.msra.mxu0 0.0
    %673 = vmatprep.subr.mxu0 0.0
    %674 = vmatpush2.xpose.msra.mxu0 0.0
    %675 = vmatprep.subr.mxu0 0.0
    %676 = vmatpush2.xpose.msra.mxu0 0.0
    %677 = vmatprep.subr.mxu0 0.0
    %678 = vmatpush2.xpose.msra.mxu0 0.0
    %679 = vmatprep.subr.mxu0 0.0
    %680 = vmatpush2.xpose.msra.mxu0 0.0
    %681 = vmatprep.subr.mxu0 0.0
    %682 = vmatpush2.xpose.msra.mxu0 0.0
    %683 = vmatprep.subr.mxu0 0.0
    %684 = vmatpush2.xpose.msra.mxu0 0.0
    %685 = vmatprep.subr.mxu0 0.0
    %686 = vmatpush2.xpose.msra.mxu0 0.0
    %687 = vmatprep.subr.mxu0 0.0
    %688 = vmatpush2.xpose.msra.mxu0 0.0
    %689 = vmatprep.subr.mxu0 0.0
    %690 = vmatpush2.xpose.msra.mxu0 0.0
    %691 = vmatprep.subr.mxu0 0.0
    %692 = vmatpush2.xpose.msra.mxu0 0.0
    %693 = vmatprep.subr.mxu0 0.0
    %694 = vmatpush2.xpose.msra.mxu0 0.0
    %695 = vmatprep.subr.mxu0 0.0
    %696 = vmatpush2.xpose.msra.mxu0 0.0
    %697 = vmatprep.subr.mxu0 0.0
    %698 = vmatpush2.xpose.msra.mxu0 0.0
    %699 = vmatprep.subr.mxu0 0.0
    %700 = vmatpush2.xpose.msra.mxu0 0.0
    %701 = vmatprep.mubr.f32.mxu0 0.0
    %702 = vmatmul.mubr.f32.gmra.mxu0 %v633
    %v703 = vpop.f32.mrf.mxu0
    %v704 = vadd.f32 0.0, %v703
    %v705 = vpop.f32.mrf.mxu0
    %706 = vdwg.mxu0
    %v707 = vsel %vm410, %v200, 0
    %v709 = vsel %vm410, %v282, 0
    %711 = vmatprep.subr.mxu0 0.0
    %712 = vmatpush1.xpose.msra.mxu0 0.0
    %713 = vmatprep.subr.mxu0 0.0
    %714 = vmatpush1.xpose.msra.mxu0 0.0
    %715 = vmatprep.subr.mxu0 0.0
    %716 = vmatpush1.xpose.msra.mxu0 0.0
    %717 = vmatprep.subr.mxu0 0.0
    %718 = vmatpush1.xpose.msra.mxu0 0.0
    %719 = vmatprep.subr.mxu0 0.0
    %720 = vmatpush1.xpose.msra.mxu0 0.0
    %721 = vmatprep.subr.mxu0 0.0
    %722 = vmatpush1.xpose.msra.mxu0 0.0
    %723 = vmatprep.subr.mxu0 0.0
    %724 = vmatpush1.xpose.msra.mxu0 0.0
    %725 = vmatprep.subr.mxu0 0.0
    %726 = vmatpush1.xpose.msra.mxu0 0.0
    %727 = vmatprep.subr.mxu0 0.0
    %728 = vmatpush1.xpose.msra.mxu0 0.0
    %729 = vmatprep.subr.mxu0 0.0
    %730 = vmatpush1.xpose.msra.mxu0 0.0
    %731 = vmatprep.subr.mxu0 0.0
    %732 = vmatpush1.xpose.msra.mxu0 0.0
    %733 = vmatprep.subr.mxu0 0.0
    %734 = vmatpush1.xpose.msra.mxu0 0.0
    %735 = vmatprep.subr.mxu0 0.0
    %736 = vmatpush1.xpose.msra.mxu0 0.0
    %737 = vmatprep.subr.mxu0 0.0
    %738 = vmatpush1.xpose.msra.mxu0 0.0
    %739 = vmatprep.subr.mxu0 0.0
    %740 = vmatpush1.xpose.msra.mxu0 0.0
    %741 = vmatprep.subr.mxu0 0.0
    %742 = vmatpush1.xpose.msra.mxu0 %v709
    %743 = vmatprep.subr.mxu0 0.0
    %744 = vmatpush2.xpose.msra.mxu0 0.0
    %745 = vmatprep.subr.mxu0 0.0
    %746 = vmatpush2.xpose.msra.mxu0 0.0
    %747 = vmatprep.subr.mxu0 0.0
    %748 = vmatpush2.xpose.msra.mxu0 0.0
    %749 = vmatprep.subr.mxu0 0.0
    %750 = vmatpush2.xpose.msra.mxu0 0.0
    %751 = vmatprep.subr.mxu0 0.0
    %752 = vmatpush2.xpose.msra.mxu0 0.0
    %753 = vmatprep.subr.mxu0 0.0
    %754 = vmatpush2.xpose.msra.mxu0 0.0
    %755 = vmatprep.subr.mxu0 0.0
    %756 = vmatpush2.xpose.msra.mxu0 0.0
    %757 = vmatprep.subr.mxu0 0.0
    %758 = vmatpush2.xpose.msra.mxu0 0.0
    %759 = vmatprep.subr.mxu0 0.0
    %760 = vmatpush2.xpose.msra.mxu0 0.0
    %761 = vmatprep.subr.mxu0 0.0
    %762 = vmatpush2.xpose.msra.mxu0 0.0
    %763 = vmatprep.subr.mxu0 0.0
    %764 = vmatpush2.xpose.msra.mxu0 0.0
    %765 = vmatprep.subr.mxu0 0.0
    %766 = vmatpush2.xpose.msra.mxu0 0.0
    %767 = vmatprep.subr.mxu0 0.0
    %768 = vmatpush2.xpose.msra.mxu0 0.0
    %769 = vmatprep.subr.mxu0 0.0
    %770 = vmatpush2.xpose.msra.mxu0 0.0
    %771 = vmatprep.subr.mxu0 0.0
    %772 = vmatpush2.xpose.msra.mxu0 0.0
    %773 = vmatprep.subr.mxu0 0.0
    %774 = vmatpush2.xpose.msra.mxu0 0.0
    %775 = vmatprep.mubr.f32.mxu0 0.0
    %776 = vmatmul.mubr.f32.gmra.mxu0 %v707
    %v777 = vpop.f32.mrf.mxu0
    %v778 = vadd.f32 0.0, %v777
    %v779 = vpop.f32.mrf.mxu0
    %780 = vdwg.mxu0
    %v781 = vsel %vm410, %v367, 0
    %v783 = vsel %vm410, %v381, 0
    %785 = vmatprep.subr.mxu0 0.0
    %786 = vmatpush1.xpose.msra.mxu0 0.0
    %787 = vmatprep.subr.mxu0 0.0
    %788 = vmatpush1.xpose.msra.mxu0 0.0
    %789 = vmatprep.subr.mxu0 0.0
    %790 = vmatpush1.xpose.msra.mxu0 0.0
    %791 = vmatprep.subr.mxu0 0.0
    %792 = vmatpush1.xpose.msra.mxu0 0.0
    %793 = vmatprep.subr.mxu0 0.0
    %794 = vmatpush1.xpose.msra.mxu0 0.0
    %795 = vmatprep.subr.mxu0 0.0
    %796 = vmatpush1.xpose.msra.mxu0 0.0
    %797 = vmatprep.subr.mxu0 0.0
    %798 = vmatpush1.xpose.msra.mxu0 0.0
    %799 = vmatprep.subr.mxu0 0.0
    %800 = vmatpush1.xpose.msra.mxu0 0.0
    %801 = vmatprep.subr.mxu0 0.0
    %802 = vmatpush1.xpose.msra.mxu0 0.0
    %803 = vmatprep.subr.mxu0 0.0
    %804 = vmatpush1.xpose.msra.mxu0 0.0
    %805 = vmatprep.subr.mxu0 0.0
    %806 = vmatpush1.xpose.msra.mxu0 0.0
    %807 = vmatprep.subr.mxu0 0.0
    %808 = vmatpush1.xpose.msra.mxu0 0.0
    %809 = vmatprep.subr.mxu0 0.0
    %810 = vmatpush1.xpose.msra.mxu0 0.0
    %811 = vmatprep.subr.mxu0 0.0
    %812 = vmatpush1.xpose.msra.mxu0 0.0
    %813 = vmatprep.subr.mxu0 0.0
    %814 = vmatpush1.xpose.msra.mxu0 0.0
    %815 = vmatprep.subr.mxu0 0.0
    %816 = vmatpush1.xpose.msra.mxu0 %v783
    %817 = vmatprep.subr.mxu0 0.0
    %818 = vmatpush2.xpose.msra.mxu0 0.0
    %819 = vmatprep.subr.mxu0 0.0
    %820 = vmatpush2.xpose.msra.mxu0 0.0
    %821 = vmatprep.subr.mxu0 0.0
    %822 = vmatpush2.xpose.msra.mxu0 0.0
    %823 = vmatprep.subr.mxu0 0.0
    %824 = vmatpush2.xpose.msra.mxu0 0.0
    %825 = vmatprep.subr.mxu0 0.0
    %826 = vmatpush2.xpose.msra.mxu0 0.0
    %827 = vmatprep.subr.mxu0 0.0
    %828 = vmatpush2.xpose.msra.mxu0 0.0
    %829 = vmatprep.subr.mxu0 0.0
    %830 = vmatpush2.xpose.msra.mxu0 0.0
    %831 = vmatprep.subr.mxu0 0.0
    %832 = vmatpush2.xpose.msra.mxu0 0.0
    %833 = vmatprep.subr.mxu0 0.0
    %834 = vmatpush2.xpose.msra.mxu0 0.0
    %835 = vmatprep.subr.mxu0 0.0
    %836 = vmatpush2.xpose.msra.mxu0 0.0
    %837 = vmatprep.subr.mxu0 0.0
    %838 = vmatpush2.xpose.msra.mxu0 0.0
    %839 = vmatprep.subr.mxu0 0.0
    %840 = vmatpush2.xpose.msra.mxu0 0.0
    %841 = vmatprep.subr.mxu0 0.0
    %842 = vmatpush2.xpose.msra.mxu0 0.0
    %843 = vmatprep.subr.mxu0 0.0
    %844 = vmatpush2.xpose.msra.mxu0 0.0
    %845 = vmatprep.subr.mxu0 0.0
    %846 = vmatpush2.xpose.msra.mxu0 0.0
    %847 = vmatprep.subr.mxu0 0.0
    %848 = vmatpush2.xpose.msra.mxu0 0.0
    %849 = vmatprep.mubr.f32.mxu0 0.0
    %850 = vmatmul.mubr.f32.gmra.mxu0 %v781
    %v851 = vpop.f32.mrf.mxu0
    %v852 = vadd.f32 0.0, %v851
    %v853 = vpop.f32.mrf.mxu0
    %854 = vdwg.mxu0
    %v855 = vsel %vm410, %v371, 0
    %v857 = vsel %vm410, %v385, 0
    %859 = vmatprep.subr.mxu0 0.0
    %860 = vmatpush1.xpose.msra.mxu0 0.0
    %861 = vmatprep.subr.mxu0 0.0
    %862 = vmatpush1.xpose.msra.mxu0 0.0
    %863 = vmatprep.subr.mxu0 0.0
    %864 = vmatpush1.xpose.msra.mxu0 0.0
    %865 = vmatprep.subr.mxu0 0.0
    %866 = vmatpush1.xpose.msra.mxu0 0.0
    %867 = vmatprep.subr.mxu0 0.0
    %868 = vmatpush1.xpose.msra.mxu0 0.0
    %869 = vmatprep.subr.mxu0 0.0
    %870 = vmatpush1.xpose.msra.mxu0 0.0
    %871 = vmatprep.subr.mxu0 0.0
    %872 = vmatpush1.xpose.msra.mxu0 0.0
    %873 = vmatprep.subr.mxu0 0.0
    %874 = vmatpush1.xpose.msra.mxu0 0.0
    %875 = vmatprep.subr.mxu0 0.0
    %876 = vmatpush1.xpose.msra.mxu0 0.0
    %877 = vmatprep.subr.mxu0 0.0
    %878 = vmatpush1.xpose.msra.mxu0 0.0
    %879 = vmatprep.subr.mxu0 0.0
    %880 = vmatpush1.xpose.msra.mxu0 0.0
    %881 = vmatprep.subr.mxu0 0.0
    %882 = vmatpush1.xpose.msra.mxu0 0.0
    %883 = vmatprep.subr.mxu0 0.0
    %884 = vmatpush1.xpose.msra.mxu0 0.0
    %885 = vmatprep.subr.mxu0 0.0
    %886 = vmatpush1.xpose.msra.mxu0 0.0
    %887 = vmatprep.subr.mxu0 0.0
    %888 = vmatpush1.xpose.msra.mxu0 0.0
    %889 = vmatprep.subr.mxu0 0.0
    %890 = vmatpush1.xpose.msra.mxu0 %v857
    %891 = vmatprep.subr.mxu0 0.0
    %892 = vmatpush2.xpose.msra.mxu0 0.0
    %893 = vmatprep.subr.mxu0 0.0
    %894 = vmatpush2.xpose.msra.mxu0 0.0
    %895 = vmatprep.subr.mxu0 0.0
    %896 = vmatpush2.xpose.msra.mxu0 0.0
    %897 = vmatprep.subr.mxu0 0.0
    %898 = vmatpush2.xpose.msra.mxu0 0.0
    %899 = vmatprep.subr.mxu0 0.0
    %900 = vmatpush2.xpose.msra.mxu0 0.0
    %901 = vmatprep.subr.mxu0 0.0
    %902 = vmatpush2.xpose.msra.mxu0 0.0
    %903 = vmatprep.subr.mxu0 0.0
    %904 = vmatpush2.xpose.msra.mxu0 0.0
    %905 = vmatprep.subr.mxu0 0.0
    %906 = vmatpush2.xpose.msra.mxu0 0.0
    %907 = vmatprep.subr.mxu0 0.0
    %908 = vmatpush2.xpose.msra.mxu0 0.0
    %909 = vmatprep.subr.mxu0 0.0
    %910 = vmatpush2.xpose.msra.mxu0 0.0
    %911 = vmatprep.subr.mxu0 0.0
    %912 = vmatpush2.xpose.msra.mxu0 0.0
    %913 = vmatprep.subr.mxu0 0.0
    %914 = vmatpush2.xpose.msra.mxu0 0.0
    %915 = vmatprep.subr.mxu0 0.0
    %916 = vmatpush2.xpose.msra.mxu0 0.0
    %917 = vmatprep.subr.mxu0 0.0
    %918 = vmatpush2.xpose.msra.mxu0 0.0
    %919 = vmatprep.subr.mxu0 0.0
    %920 = vmatpush2.xpose.msra.mxu0 0.0
    %921 = vmatprep.subr.mxu0 0.0
    %922 = vmatpush2.xpose.msra.mxu0 0.0
    %923 = vmatprep.mubr.f32.mxu0 0.0
    %924 = vmatmul.mubr.f32.gmra.mxu0 %v855
    %v925 = vpop.f32.mrf.mxu0
    %v926 = vadd.f32 0.0, %v925
    %v927 = vpop.f32.mrf.mxu0
    %928 = vdwg.mxu0
    %v929 = vsel %vm410, %v375, 0
    %v931 = vsel %vm410, %v389, 0
    %933 = vmatprep.subr.mxu0 0.0
    %934 = vmatpush1.xpose.msra.mxu0 0.0
    %935 = vmatprep.subr.mxu0 0.0
    %936 = vmatpush1.xpose.msra.mxu0 0.0
    %937 = vmatprep.subr.mxu0 0.0
    %938 = vmatpush1.xpose.msra.mxu0 0.0
    %939 = vmatprep.subr.mxu0 0.0
    %940 = vmatpush1.xpose.msra.mxu0 0.0
    %941 = vmatprep.subr.mxu0 0.0
    %942 = vmatpush1.xpose.msra.mxu0 0.0
    %943 = vmatprep.subr.mxu0 0.0
    %944 = vmatpush1.xpose.msra.mxu0 0.0
    %945 = vmatprep.subr.mxu0 0.0
    %946 = vmatpush1.xpose.msra.mxu0 0.0
    %947 = vmatprep.subr.mxu0 0.0
    %948 = vmatpush1.xpose.msra.mxu0 0.0
    %949 = vmatprep.subr.mxu0 0.0
    %950 = vmatpush1.xpose.msra.mxu0 0.0
    %951 = vmatprep.subr.mxu0 0.0
    %952 = vmatpush1.xpose.msra.mxu0 0.0
    %953 = vmatprep.subr.mxu0 0.0
    %954 = vmatpush1.xpose.msra.mxu0 0.0
    %955 = vmatprep.subr.mxu0 0.0
    %956 = vmatpush1.xpose.msra.mxu0 0.0
    %957 = vmatprep.subr.mxu0 0.0
    %958 = vmatpush1.xpose.msra.mxu0 0.0
    %959 = vmatprep.subr.mxu0 0.0
    %960 = vmatpush1.xpose.msra.mxu0 0.0
    %961 = vmatprep.subr.mxu0 0.0
    %962 = vmatpush1.xpose.msra.mxu0 0.0
    %963 = vmatprep.subr.mxu0 0.0
    %964 = vmatpush1.xpose.msra.mxu0 %v931
    %965 = vmatprep.subr.mxu0 0.0
    %966 = vmatpush2.xpose.msra.mxu0 0.0
    %967 = vmatprep.subr.mxu0 0.0
    %968 = vmatpush2.xpose.msra.mxu0 0.0
    %969 = vmatprep.subr.mxu0 0.0
    %970 = vmatpush2.xpose.msra.mxu0 0.0
    %971 = vmatprep.subr.mxu0 0.0
    %972 = vmatpush2.xpose.msra.mxu0 0.0
    %973 = vmatprep.subr.mxu0 0.0
    %974 = vmatpush2.xpose.msra.mxu0 0.0
    %975 = vmatprep.subr.mxu0 0.0
    %976 = vmatpush2.xpose.msra.mxu0 0.0
    %977 = vmatprep.subr.mxu0 0.0
    %978 = vmatpush2.xpose.msra.mxu0 0.0
    %979 = vmatprep.subr.mxu0 0.0
    %980 = vmatpush2.xpose.msra.mxu0 0.0
    %981 = vmatprep.subr.mxu0 0.0
    %982 = vmatpush2.xpose.msra.mxu0 0.0
    %983 = vmatprep.subr.mxu0 0.0
    %984 = vmatpush2.xpose.msra.mxu0 0.0
    %985 = vmatprep.subr.mxu0 0.0
    %986 = vmatpush2.xpose.msra.mxu0 0.0
    %987 = vmatprep.subr.mxu0 0.0
    %988 = vmatpush2.xpose.msra.mxu0 0.0
    %989 = vmatprep.subr.mxu0 0.0
    %990 = vmatpush2.xpose.msra.mxu0 0.0
    %991 = vmatprep.subr.mxu0 0.0
    %992 = vmatpush2.xpose.msra.mxu0 0.0
    %993 = vmatprep.subr.mxu0 0.0
    %994 = vmatpush2.xpose.msra.mxu0 0.0
    %995 = vmatprep.subr.mxu0 0.0
    %996 = vmatpush2.xpose.msra.mxu0 0.0
    %997 = vmatprep.mubr.f32.mxu0 0.0
    %998 = vmatmul.mubr.f32.gmra.mxu0 %v929
    %v999 = vpop.f32.mrf.mxu0
    %v1000 = vadd.f32 0.0, %v999
    %v1001 = vpop.f32.mrf.mxu0
    %1002 = vdwg.mxu0
    %v1003 = vsel %vm410, %v482, -inf
    %1004 = vmax.xlane.f32.xlu0 %v1003
    %v1005 = vpop.xlane.xlu0 %1004
    %v1006 = vsel %vm410, %v556, -inf
    %1007 = vmax.xlane.f32.xlu0 %v1006
    %v1008 = vpop.xlane.xlu0 %1007
    %v1009 = vsel %vm410, %v630, -inf
    %1010 = vmax.xlane.f32.xlu0 %v1009
    %v1011 = vpop.xlane.xlu0 %1010
    %v1012 = vsel %vm410, %v704, -inf
    %1013 = vmax.xlane.f32.xlu0 %v1012
    %v1014 = vpop.xlane.xlu0 %1013
    %v1015 = vsel %vm410, %v778, -inf
    %1016 = vmax.xlane.f32.xlu0 %v1015
    %v1017 = vpop.xlane.xlu0 %1016
    %v1018 = vsel %vm410, %v852, -inf
    %1019 = vmax.xlane.f32.xlu0 %v1018
    %v1020 = vpop.xlane.xlu0 %1019
    %v1021 = vsel %vm410, %v926, -inf
    %1022 = vmax.xlane.f32.xlu0 %v1021
    %v1023 = vpop.xlane.xlu0 %1022
    %v1024 = vsel %vm410, %v1000, -inf
    %1025 = vmax.xlane.f32.xlu0 %v1024
    %v1026 = vpop.xlane.xlu0 %1025
    %v1027 = vsub.f32 %v482, %v1005
    %v1028 = vsub.f32 %v556, %v1008
    %v1029 = vsub.f32 %v630, %v1011
    %v1030 = vsub.f32 %v704, %v1014
    %v1031 = vsub.f32 %v778, %v1017
    %v1032 = vsub.f32 %v852, %v1020
    %v1033 = vsub.f32 %v926, %v1023
    %v1034 = vsub.f32 %v1000, %v1026
    %v1035 = vmul.f32 %v1027, 1.442695
    %v1036 = vpow.pop %v1035
    %v1037 = vmul.f32 %v1028, 1.442695
    %v1038 = vpow.pop %v1037
    %v1039 = vmul.f32 %v1029, 1.442695
    %v1040 = vpow.pop %v1039
    %v1041 = vmul.f32 %v1030, 1.442695
    %v1042 = vpow.pop %v1041
    %v1043 = vmul.f32 %v1031, 1.442695
    %v1044 = vpow.pop %v1043
    %v1045 = vmul.f32 %v1032, 1.442695
    %v1046 = vpow.pop %v1045
    %v1047 = vmul.f32 %v1033, 1.442695
    %v1048 = vpow.pop %v1047
    %v1049 = vmul.f32 %v1034, 1.442695
    %v1050 = vpow.pop %v1049
    %v1051 = vsel %vm410, %v1036, 0.0
    %1052 = vadd.xlane.f32.xlu0 %v1051
    %v1053 = vpop.xlane.xlu0 %1052
    %v1054 = vsel %vm410, %v1038, 0.0
    %1055 = vadd.xlane.f32.xlu0 %v1054
    %v1056 = vpop.xlane.xlu0 %1055
    %v1057 = vsel %vm410, %v1040, 0.0
    %1058 = vadd.xlane.f32.xlu0 %v1057
    %v1059 = vpop.xlane.xlu0 %1058
    %v1060 = vsel %vm410, %v1042, 0.0
    %1061 = vadd.xlane.f32.xlu0 %v1060
    %v1062 = vpop.xlane.xlu0 %1061
    %v1063 = vsel %vm410, %v1044, 0.0
    %1064 = vadd.xlane.f32.xlu0 %v1063
    %v1065 = vpop.xlane.xlu0 %1064
    %v1066 = vsel %vm410, %v1046, 0.0
    %1067 = vadd.xlane.f32.xlu0 %v1066
    %v1068 = vpop.xlane.xlu0 %1067
    %v1069 = vsel %vm410, %v1048, 0.0
    %1070 = vadd.xlane.f32.xlu0 %v1069
    %v1071 = vpop.xlane.xlu0 %1070
    %v1072 = vsel %vm410, %v1050, 0.0
    %1073 = vadd.xlane.f32.xlu0 %v1072
    %v1074 = vpop.xlane.xlu0 %1073
    %v1075 = vrcp.pop %v1053
    %v1076 = vrcp.pop %v1056
    %v1077 = vrcp.pop %v1059
    %v1078 = vrcp.pop %v1062
    %v1079 = vrcp.pop %v1065
    %v1080 = vrcp.pop %v1068
    %v1081 = vrcp.pop %v1071
    %v1082 = vrcp.pop %v1074
    %v1083 = vmul.f32 %v1036, %v1075
    %v1084 = vmul.f32 %v1038, %v1076
    %v1085 = vmul.f32 %v1040, %v1077
    %v1086 = vmul.f32 %v1042, %v1078
    %v1087 = vmul.f32 %v1044, %v1079
    %v1088 = vmul.f32 %v1046, %v1080
    %v1089 = vmul.f32 %v1048, %v1081
    %v1090 = vmul.f32 %v1050, %v1082
    %v1092 = vsel %vm410, %v1083, 0
    %1094 = vmatprep.subr.mxu0 0.0
    %1095 = vmatpush1.msra.mxu0 0.0
    %1096 = vmatprep.subr.mxu0 0.0
    %1097 = vmatpush1.msra.mxu0 0.0
    %1098 = vmatprep.subr.mxu0 0.0
    %1099 = vmatpush1.msra.mxu0 0.0
    %1100 = vmatprep.subr.mxu0 0.0
    %1101 = vmatpush1.msra.mxu0 0.0
    %1102 = vmatprep.subr.mxu0 0.0
    %1103 = vmatpush1.msra.mxu0 0.0
    %1104 = vmatprep.subr.mxu0 0.0
    %1105 = vmatpush1.msra.mxu0 0.0
    %1106 = vmatprep.subr.mxu0 0.0
    %1107 = vmatpush1.msra.mxu0 0.0
    %1108 = vmatprep.subr.mxu0 0.0
    %1109 = vmatpush1.msra.mxu0 0.0
    %1110 = vmatprep.subr.mxu0 0.0
    %1111 = vmatpush1.msra.mxu0 0.0
    %1112 = vmatprep.subr.mxu0 0.0
    %1113 = vmatpush1.msra.mxu0 0.0
    %1114 = vmatprep.subr.mxu0 0.0
    %1115 = vmatpush1.msra.mxu0 0.0
    %1116 = vmatprep.subr.mxu0 0.0
    %1117 = vmatpush1.msra.mxu0 0.0
    %1118 = vmatprep.subr.mxu0 0.0
    %1119 = vmatpush1.msra.mxu0 0.0
    %1120 = vmatprep.subr.mxu0 0.0
    %1121 = vmatpush1.msra.mxu0 0.0
    %1122 = vmatprep.subr.mxu0 0.0
    %1123 = vmatpush1.msra.mxu0 0.0
    %1124 = vmatprep.subr.mxu0 0.0
    %1125 = vmatpush1.msra.mxu0 %v354
    %1126 = vmatprep.subr.mxu0 0.0
    %1127 = vmatpush2.msra.mxu0 0.0
    %1128 = vmatprep.subr.mxu0 0.0
    %1129 = vmatpush2.msra.mxu0 0.0
    %1130 = vmatprep.subr.mxu0 0.0
    %1131 = vmatpush2.msra.mxu0 0.0
    %1132 = vmatprep.subr.mxu0 0.0
    %1133 = vmatpush2.msra.mxu0 0.0
    %1134 = vmatprep.subr.mxu0 0.0
    %1135 = vmatpush2.msra.mxu0 0.0
    %1136 = vmatprep.subr.mxu0 0.0
    %1137 = vmatpush2.msra.mxu0 0.0
    %1138 = vmatprep.subr.mxu0 0.0
    %1139 = vmatpush2.msra.mxu0 0.0
    %1140 = vmatprep.subr.mxu0 0.0
    %1141 = vmatpush2.msra.mxu0 0.0
    %1142 = vmatprep.subr.mxu0 0.0
    %1143 = vmatpush2.msra.mxu0 0.0
    %1144 = vmatprep.subr.mxu0 0.0
    %1145 = vmatpush2.msra.mxu0 0.0
    %1146 = vmatprep.subr.mxu0 0.0
    %1147 = vmatpush2.msra.mxu0 0.0
    %1148 = vmatprep.subr.mxu0 0.0
    %1149 = vmatpush2.msra.mxu0 0.0
    %1150 = vmatprep.subr.mxu0 0.0
    %1151 = vmatpush2.msra.mxu0 0.0
    %1152 = vmatprep.subr.mxu0 0.0
    %1153 = vmatpush2.msra.mxu0 0.0
    %1154 = vmatprep.subr.mxu0 0.0
    %1155 = vmatpush2.msra.mxu0 0.0
    %1156 = vmatprep.subr.mxu0 0.0
    %1157 = vmatpush2.msra.mxu0 0.0
    %1158 = vmatprep.mubr.f32.mxu0 0.0
    %1159 = vmatmul.mubr.f32.gmra.mxu0 %v1092
    %v1160 = vpop.f32.mrf.mxu0
    %v1161 = vadd.f32 0.0, %v1160
    %v1162 = vpop.f32.mrf.mxu0
    %1163 = vdwg.mxu0
    %v1165 = vsel %vm410, %v1084, 0
    %1167 = vmatprep.subr.mxu0 0.0
    %1168 = vmatpush1.msra.mxu0 0.0
    %1169 = vmatprep.subr.mxu0 0.0
    %1170 = vmatpush1.msra.mxu0 0.0
    %1171 = vmatprep.subr.mxu0 0.0
    %1172 = vmatpush1.msra.mxu0 0.0
    %1173 = vmatprep.subr.mxu0 0.0
    %1174 = vmatpush1.msra.mxu0 0.0
    %1175 = vmatprep.subr.mxu0 0.0
    %1176 = vmatpush1.msra.mxu0 0.0
    %1177 = vmatprep.subr.mxu0 0.0
    %1178 = vmatpush1.msra.mxu0 0.0
    %1179 = vmatprep.subr.mxu0 0.0
    %1180 = vmatpush1.msra.mxu0 0.0
    %1181 = vmatprep.subr.mxu0 0.0
    %1182 = vmatpush1.msra.mxu0 0.0
    %1183 = vmatprep.subr.mxu0 0.0
    %1184 = vmatpush1.msra.mxu0 0.0
    %1185 = vmatprep.subr.mxu0 0.0
    %1186 = vmatpush1.msra.mxu0 0.0
    %1187 = vmatprep.subr.mxu0 0.0
    %1188 = vmatpush1.msra.mxu0 0.0
    %1189 = vmatprep.subr.mxu0 0.0
    %1190 = vmatpush1.msra.mxu0 0.0
    %1191 = vmatprep.subr.mxu0 0.0
    %1192 = vmatpush1.msra.mxu0 0.0
    %1193 = vmatprep.subr.mxu0 0.0
    %1194 = vmatpush1.msra.mxu0 0.0
    %1195 = vmatprep.subr.mxu0 0.0
    %1196 = vmatpush1.msra.mxu0 0.0
    %1197 = vmatprep.subr.mxu0 0.0
    %1198 = vmatpush1.msra.mxu0 %v393
    %1199 = vmatprep.subr.mxu0 0.0
    %1200 = vmatpush2.msra.mxu0 0.0
    %1201 = vmatprep.subr.mxu0 0.0
    %1202 = vmatpush2.msra.mxu0 0.0
    %1203 = vmatprep.subr.mxu0 0.0
    %1204 = vmatpush2.msra.mxu0 0.0
    %1205 = vmatprep.subr.mxu0 0.0
    %1206 = vmatpush2.msra.mxu0 0.0
    %1207 = vmatprep.subr.mxu0 0.0
    %1208 = vmatpush2.msra.mxu0 0.0
    %1209 = vmatprep.subr.mxu0 0.0
    %1210 = vmatpush2.msra.mxu0 0.0
    %1211 = vmatprep.subr.mxu0 0.0
    %1212 = vmatpush2.msra.mxu0 0.0
    %1213 = vmatprep.subr.mxu0 0.0
    %1214 = vmatpush2.msra.mxu0 0.0
    %1215 = vmatprep.subr.mxu0 0.0
    %1216 = vmatpush2.msra.mxu0 0.0
    %1217 = vmatprep.subr.mxu0 0.0
    %1218 = vmatpush2.msra.mxu0 0.0
    %1219 = vmatprep.subr.mxu0 0.0
    %1220 = vmatpush2.msra.mxu0 0.0
    %1221 = vmatprep.subr.mxu0 0.0
    %1222 = vmatpush2.msra.mxu0 0.0
    %1223 = vmatprep.subr.mxu0 0.0
    %1224 = vmatpush2.msra.mxu0 0.0
    %1225 = vmatprep.subr.mxu0 0.0
    %1226 = vmatpush2.msra.mxu0 0.0
    %1227 = vmatprep.subr.mxu0 0.0
    %1228 = vmatpush2.msra.mxu0 0.0
    %1229 = vmatprep.subr.mxu0 0.0
    %1230 = vmatpush2.msra.mxu0 0.0
    %1231 = vmatprep.mubr.f32.mxu0 0.0
    %1232 = vmatmul.mubr.f32.gmra.mxu0 %v1165
    %v1233 = vpop.f32.mrf.mxu0
    %v1234 = vadd.f32 0.0, %v1233
    %v1235 = vpop.f32.mrf.mxu0
    %1236 = vdwg.mxu0
    %v1238 = vsel %vm410, %v1085, 0
    %1240 = vmatprep.subr.mxu0 0.0
    %1241 = vmatpush1.msra.mxu0 0.0
    %1242 = vmatprep.subr.mxu0 0.0
    %1243 = vmatpush1.msra.mxu0 0.0
    %1244 = vmatprep.subr.mxu0 0.0
    %1245 = vmatpush1.msra.mxu0 0.0
    %1246 = vmatprep.subr.mxu0 0.0
    %1247 = vmatpush1.msra.mxu0 0.0
    %1248 = vmatprep.subr.mxu0 0.0
    %1249 = vmatpush1.msra.mxu0 0.0
    %1250 = vmatprep.subr.mxu0 0.0
    %1251 = vmatpush1.msra.mxu0 0.0
    %1252 = vmatprep.subr.mxu0 0.0
    %1253 = vmatpush1.msra.mxu0 0.0
    %1254 = vmatprep.subr.mxu0 0.0
    %1255 = vmatpush1.msra.mxu0 0.0
    %1256 = vmatprep.subr.mxu0 0.0
    %1257 = vmatpush1.msra.mxu0 0.0
    %1258 = vmatprep.subr.mxu0 0.0
    %1259 = vmatpush1.msra.mxu0 0.0
    %1260 = vmatprep.subr.mxu0 0.0
    %1261 = vmatpush1.msra.mxu0 0.0
    %1262 = vmatprep.subr.mxu0 0.0
    %1263 = vmatpush1.msra.mxu0 0.0
    %1264 = vmatprep.subr.mxu0 0.0
    %1265 = vmatpush1.msra.mxu0 0.0
    %1266 = vmatprep.subr.mxu0 0.0
    %1267 = vmatpush1.msra.mxu0 0.0
    %1268 = vmatprep.subr.mxu0 0.0
    %1269 = vmatpush1.msra.mxu0 0.0
    %1270 = vmatprep.subr.mxu0 0.0
    %1271 = vmatpush1.msra.mxu0 %v399
    %1272 = vmatprep.subr.mxu0 0.0
    %1273 = vmatpush2.msra.mxu0 0.0
    %1274 = vmatprep.subr.mxu0 0.0
    %1275 = vmatpush2.msra.mxu0 0.0
    %1276 = vmatprep.subr.mxu0 0.0
    %1277 = vmatpush2.msra.mxu0 0.0
    %1278 = vmatprep.subr.mxu0 0.0
    %1279 = vmatpush2.msra.mxu0 0.0
    %1280 = vmatprep.subr.mxu0 0.0
    %1281 = vmatpush2.msra.mxu0 0.0
    %1282 = vmatprep.subr.mxu0 0.0
    %1283 = vmatpush2.msra.mxu0 0.0
    %1284 = vmatprep.subr.mxu0 0.0
    %1285 = vmatpush2.msra.mxu0 0.0
    %1286 = vmatprep.subr.mxu0 0.0
    %1287 = vmatpush2.msra.mxu0 0.0
    %1288 = vmatprep.subr.mxu0 0.0
    %1289 = vmatpush2.msra.mxu0 0.0
    %1290 = vmatprep.subr.mxu0 0.0
    %1291 = vmatpush2.msra.mxu0 0.0
    %1292 = vmatprep.subr.mxu0 0.0
    %1293 = vmatpush2.msra.mxu0 0.0
    %1294 = vmatprep.subr.mxu0 0.0
    %1295 = vmatpush2.msra.mxu0 0.0
    %1296 = vmatprep.subr.mxu0 0.0
    %1297 = vmatpush2.msra.mxu0 0.0
    %1298 = vmatprep.subr.mxu0 0.0
    %1299 = vmatpush2.msra.mxu0 0.0
    %1300 = vmatprep.subr.mxu0 0.0
    %1301 = vmatpush2.msra.mxu0 0.0
    %1302 = vmatprep.subr.mxu0 0.0
    %1303 = vmatpush2.msra.mxu0 0.0
    %1304 = vmatprep.mubr.f32.mxu0 0.0
    %1305 = vmatmul.mubr.f32.gmra.mxu0 %v1238
    %v1306 = vpop.f32.mrf.mxu0
    %v1307 = vadd.f32 0.0, %v1306
    %v1308 = vpop.f32.mrf.mxu0
    %1309 = vdwg.mxu0
    %v1311 = vsel %vm410, %v1086, 0
    %1313 = vmatprep.subr.mxu0 0.0
    %1314 = vmatpush1.msra.mxu0 0.0
    %1315 = vmatprep.subr.mxu0 0.0
    %1316 = vmatpush1.msra.mxu0 0.0
    %1317 = vmatprep.subr.mxu0 0.0
    %1318 = vmatpush1.msra.mxu0 0.0
    %1319 = vmatprep.subr.mxu0 0.0
    %1320 = vmatpush1.msra.mxu0 0.0
    %1321 = vmatprep.subr.mxu0 0.0
    %1322 = vmatpush1.msra.mxu0 0.0
    %1323 = vmatprep.subr.mxu0 0.0
    %1324 = vmatpush1.msra.mxu0 0.0
    %1325 = vmatprep.subr.mxu0 0.0
    %1326 = vmatpush1.msra.mxu0 0.0
    %1327 = vmatprep.subr.mxu0 0.0
    %1328 = vmatpush1.msra.mxu0 0.0
    %1329 = vmatprep.subr.mxu0 0.0
    %1330 = vmatpush1.msra.mxu0 0.0
    %1331 = vmatprep.subr.mxu0 0.0
    %1332 = vmatpush1.msra.mxu0 0.0
    %1333 = vmatprep.subr.mxu0 0.0
    %1334 = vmatpush1.msra.mxu0 0.0
    %1335 = vmatprep.subr.mxu0 0.0
    %1336 = vmatpush1.msra.mxu0 0.0
    %1337 = vmatprep.subr.mxu0 0.0
    %1338 = vmatpush1.msra.mxu0 0.0
    %1339 = vmatprep.subr.mxu0 0.0
    %1340 = vmatpush1.msra.mxu0 0.0
    %1341 = vmatprep.subr.mxu0 0.0
    %1342 = vmatpush1.msra.mxu0 0.0
    %1343 = vmatprep.subr.mxu0 0.0
    %1344 = vmatpush1.msra.mxu0 %v405
    %1345 = vmatprep.subr.mxu0 0.0
    %1346 = vmatpush2.msra.mxu0 0.0
    %1347 = vmatprep.subr.mxu0 0.0
    %1348 = vmatpush2.msra.mxu0 0.0
    %1349 = vmatprep.subr.mxu0 0.0
    %1350 = vmatpush2.msra.mxu0 0.0
    %1351 = vmatprep.subr.mxu0 0.0
    %1352 = vmatpush2.msra.mxu0 0.0
    %1353 = vmatprep.subr.mxu0 0.0
    %1354 = vmatpush2.msra.mxu0 0.0
    %1355 = vmatprep.subr.mxu0 0.0
    %1356 = vmatpush2.msra.mxu0 0.0
    %1357 = vmatprep.subr.mxu0 0.0
    %1358 = vmatpush2.msra.mxu0 0.0
    %1359 = vmatprep.subr.mxu0 0.0
    %1360 = vmatpush2.msra.mxu0 0.0
    %1361 = vmatprep.subr.mxu0 0.0
    %1362 = vmatpush2.msra.mxu0 0.0
    %1363 = vmatprep.subr.mxu0 0.0
    %1364 = vmatpush2.msra.mxu0 0.0
    %1365 = vmatprep.subr.mxu0 0.0
    %1366 = vmatpush2.msra.mxu0 0.0
    %1367 = vmatprep.subr.mxu0 0.0
    %1368 = vmatpush2.msra.mxu0 0.0
    %1369 = vmatprep.subr.mxu0 0.0
    %1370 = vmatpush2.msra.mxu0 0.0
    %1371 = vmatprep.subr.mxu0 0.0
    %1372 = vmatpush2.msra.mxu0 0.0
    %1373 = vmatprep.subr.mxu0 0.0
    %1374 = vmatpush2.msra.mxu0 0.0
    %1375 = vmatprep.subr.mxu0 0.0
    %1376 = vmatpush2.msra.mxu0 0.0
    %1377 = vmatprep.mubr.f32.mxu0 0.0
    %1378 = vmatmul.mubr.f32.gmra.mxu0 %v1311
    %v1379 = vpop.f32.mrf.mxu0
    %v1380 = vadd.f32 0.0, %v1379
    %v1381 = vpop.f32.mrf.mxu0
    %1382 = vdwg.mxu0
    %v1384 = vsel %vm410, %v1087, 0
    %1386 = vmatprep.subr.mxu0 0.0
    %1387 = vmatpush1.msra.mxu0 0.0
    %1388 = vmatprep.subr.mxu0 0.0
    %1389 = vmatpush1.msra.mxu0 0.0
    %1390 = vmatprep.subr.mxu0 0.0
    %1391 = vmatpush1.msra.mxu0 0.0
    %1392 = vmatprep.subr.mxu0 0.0
    %1393 = vmatpush1.msra.mxu0 0.0
    %1394 = vmatprep.subr.mxu0 0.0
    %1395 = vmatpush1.msra.mxu0 0.0
    %1396 = vmatprep.subr.mxu0 0.0
    %1397 = vmatpush1.msra.mxu0 0.0
    %1398 = vmatprep.subr.mxu0 0.0
    %1399 = vmatpush1.msra.mxu0 0.0
    %1400 = vmatprep.subr.mxu0 0.0
    %1401 = vmatpush1.msra.mxu0 0.0
    %1402 = vmatprep.subr.mxu0 0.0
    %1403 = vmatpush1.msra.mxu0 0.0
    %1404 = vmatprep.subr.mxu0 0.0
    %1405 = vmatpush1.msra.mxu0 0.0
    %1406 = vmatprep.subr.mxu0 0.0
    %1407 = vmatpush1.msra.mxu0 0.0
    %1408 = vmatprep.subr.mxu0 0.0
    %1409 = vmatpush1.msra.mxu0 0.0
    %1410 = vmatprep.subr.mxu0 0.0
    %1411 = vmatpush1.msra.mxu0 0.0
    %1412 = vmatprep.subr.mxu0 0.0
    %1413 = vmatpush1.msra.mxu0 0.0
    %1414 = vmatprep.subr.mxu0 0.0
    %1415 = vmatpush1.msra.mxu0 0.0
    %1416 = vmatprep.subr.mxu0 0.0
    %1417 = vmatpush1.msra.mxu0 %v359
    %1418 = vmatprep.subr.mxu0 0.0
    %1419 = vmatpush2.msra.mxu0 0.0
    %1420 = vmatprep.subr.mxu0 0.0
    %1421 = vmatpush2.msra.mxu0 0.0
    %1422 = vmatprep.subr.mxu0 0.0
    %1423 = vmatpush2.msra.mxu0 0.0
    %1424 = vmatprep.subr.mxu0 0.0
    %1425 = vmatpush2.msra.mxu0 0.0
    %1426 = vmatprep.subr.mxu0 0.0
    %1427 = vmatpush2.msra.mxu0 0.0
    %1428 = vmatprep.subr.mxu0 0.0
    %1429 = vmatpush2.msra.mxu0 0.0
    %1430 = vmatprep.subr.mxu0 0.0
    %1431 = vmatpush2.msra.mxu0 0.0
    %1432 = vmatprep.subr.mxu0 0.0
    %1433 = vmatpush2.msra.mxu0 0.0
    %1434 = vmatprep.subr.mxu0 0.0
    %1435 = vmatpush2.msra.mxu0 0.0
    %1436 = vmatprep.subr.mxu0 0.0
    %1437 = vmatpush2.msra.mxu0 0.0
    %1438 = vmatprep.subr.mxu0 0.0
    %1439 = vmatpush2.msra.mxu0 0.0
    %1440 = vmatprep.subr.mxu0 0.0
    %1441 = vmatpush2.msra.mxu0 0.0
    %1442 = vmatprep.subr.mxu0 0.0
    %1443 = vmatpush2.msra.mxu0 0.0
    %1444 = vmatprep.subr.mxu0 0.0
    %1445 = vmatpush2.msra.mxu0 0.0
    %1446 = vmatprep.subr.mxu0 0.0
    %1447 = vmatpush2.msra.mxu0 0.0
    %1448 = vmatprep.subr.mxu0 0.0
    %1449 = vmatpush2.msra.mxu0 0.0
    %1450 = vmatprep.mubr.f32.mxu0 0.0
    %1451 = vmatmul.mubr.f32.gmra.mxu0 %v1384
    %v1452 = vpop.f32.mrf.mxu0
    %v1453 = vadd.f32 0.0, %v1452
    %v1454 = vpop.f32.mrf.mxu0
    %1455 = vdwg.mxu0
    %v1457 = vsel %vm410, %v1088, 0
    %1459 = vmatprep.subr.mxu0 0.0
    %1460 = vmatpush1.msra.mxu0 0.0
    %1461 = vmatprep.subr.mxu0 0.0
    %1462 = vmatpush1.msra.mxu0 0.0
    %1463 = vmatprep.subr.mxu0 0.0
    %1464 = vmatpush1.msra.mxu0 0.0
    %1465 = vmatprep.subr.mxu0 0.0
    %1466 = vmatpush1.msra.mxu0 0.0
    %1467 = vmatprep.subr.mxu0 0.0
    %1468 = vmatpush1.msra.mxu0 0.0
    %1469 = vmatprep.subr.mxu0 0.0
    %1470 = vmatpush1.msra.mxu0 0.0
    %1471 = vmatprep.subr.mxu0 0.0
    %1472 = vmatpush1.msra.mxu0 0.0
    %1473 = vmatprep.subr.mxu0 0.0
    %1474 = vmatpush1.msra.mxu0 0.0
    %1475 = vmatprep.subr.mxu0 0.0
    %1476 = vmatpush1.msra.mxu0 0.0
    %1477 = vmatprep.subr.mxu0 0.0
    %1478 = vmatpush1.msra.mxu0 0.0
    %1479 = vmatprep.subr.mxu0 0.0
    %1480 = vmatpush1.msra.mxu0 0.0
    %1481 = vmatprep.subr.mxu0 0.0
    %1482 = vmatpush1.msra.mxu0 0.0
    %1483 = vmatprep.subr.mxu0 0.0
    %1484 = vmatpush1.msra.mxu0 0.0
    %1485 = vmatprep.subr.mxu0 0.0
    %1486 = vmatpush1.msra.mxu0 0.0
    %1487 = vmatprep.subr.mxu0 0.0
    %1488 = vmatpush1.msra.mxu0 0.0
    %1489 = vmatprep.subr.mxu0 0.0
    %1490 = vmatpush1.msra.mxu0 %v395
    %1491 = vmatprep.subr.mxu0 0.0
    %1492 = vmatpush2.msra.mxu0 0.0
    %1493 = vmatprep.subr.mxu0 0.0
    %1494 = vmatpush2.msra.mxu0 0.0
    %1495 = vmatprep.subr.mxu0 0.0
    %1496 = vmatpush2.msra.mxu0 0.0
    %1497 = vmatprep.subr.mxu0 0.0
    %1498 = vmatpush2.msra.mxu0 0.0
    %1499 = vmatprep.subr.mxu0 0.0
    %1500 = vmatpush2.msra.mxu0 0.0
    %1501 = vmatprep.subr.mxu0 0.0
    %1502 = vmatpush2.msra.mxu0 0.0
    %1503 = vmatprep.subr.mxu0 0.0
    %1504 = vmatpush2.msra.mxu0 0.0
    %1505 = vmatprep.subr.mxu0 0.0
    %1506 = vmatpush2.msra.mxu0 0.0
    %1507 = vmatprep.subr.mxu0 0.0
    %1508 = vmatpush2.msra.mxu0 0.0
    %1509 = vmatprep.subr.mxu0 0.0
    %1510 = vmatpush2.msra.mxu0 0.0
    %1511 = vmatprep.subr.mxu0 0.0
    %1512 = vmatpush2.msra.mxu0 0.0
    %1513 = vmatprep.subr.mxu0 0.0
    %1514 = vmatpush2.msra.mxu0 0.0
    %1515 = vmatprep.subr.mxu0 0.0
    %1516 = vmatpush2.msra.mxu0 0.0
    %1517 = vmatprep.subr.mxu0 0.0
    %1518 = vmatpush2.msra.mxu0 0.0
    %1519 = vmatprep.subr.mxu0 0.0
    %1520 = vmatpush2.msra.mxu0 0.0
    %1521 = vmatprep.subr.mxu0 0.0
    %1522 = vmatpush2.msra.mxu0 0.0
    %1523 = vmatprep.mubr.f32.mxu0 0.0
    %1524 = vmatmul.mubr.f32.gmra.mxu0 %v1457
    %v1525 = vpop.f32.mrf.mxu0
    %v1526 = vadd.f32 0.0, %v1525
    %v1527 = vpop.f32.mrf.mxu0
    %1528 = vdwg.mxu0
    %v1530 = vsel %vm410, %v1089, 0
    %1532 = vmatprep.subr.mxu0 0.0
    %1533 = vmatpush1.msra.mxu0 0.0
    %1534 = vmatprep.subr.mxu0 0.0
    %1535 = vmatpush1.msra.mxu0 0.0
    %1536 = vmatprep.subr.mxu0 0.0
    %1537 = vmatpush1.msra.mxu0 0.0
    %1538 = vmatprep.subr.mxu0 0.0
    %1539 = vmatpush1.msra.mxu0 0.0
    %1540 = vmatprep.subr.mxu0 0.0
    %1541 = vmatpush1.msra.mxu0 0.0
    %1542 = vmatprep.subr.mxu0 0.0
    %1543 = vmatpush1.msra.mxu0 0.0
    %1544 = vmatprep.subr.mxu0 0.0
    %1545 = vmatpush1.msra.mxu0 0.0
    %1546 = vmatprep.subr.mxu0 0.0
    %1547 = vmatpush1.msra.mxu0 0.0
    %1548 = vmatprep.subr.mxu0 0.0
    %1549 = vmatpush1.msra.mxu0 0.0
    %1550 = vmatprep.subr.mxu0 0.0
    %1551 = vmatpush1.msra.mxu0 0.0
    %1552 = vmatprep.subr.mxu0 0.0
    %1553 = vmatpush1.msra.mxu0 0.0
    %1554 = vmatprep.subr.mxu0 0.0
    %1555 = vmatpush1.msra.mxu0 0.0
    %1556 = vmatprep.subr.mxu0 0.0
    %1557 = vmatpush1.msra.mxu0 0.0
    %1558 = vmatprep.subr.mxu0 0.0
    %1559 = vmatpush1.msra.mxu0 0.0
    %1560 = vmatprep.subr.mxu0 0.0
    %1561 = vmatpush1.msra.mxu0 0.0
    %1562 = vmatprep.subr.mxu0 0.0
    %1563 = vmatpush1.msra.mxu0 %v401
    %1564 = vmatprep.subr.mxu0 0.0
    %1565 = vmatpush2.msra.mxu0 0.0
    %1566 = vmatprep.subr.mxu0 0.0
    %1567 = vmatpush2.msra.mxu0 0.0
    %1568 = vmatprep.subr.mxu0 0.0
    %1569 = vmatpush2.msra.mxu0 0.0
    %1570 = vmatprep.subr.mxu0 0.0
    %1571 = vmatpush2.msra.mxu0 0.0
    %1572 = vmatprep.subr.mxu0 0.0
    %1573 = vmatpush2.msra.mxu0 0.0
    %1574 = vmatprep.subr.mxu0 0.0
    %1575 = vmatpush2.msra.mxu0 0.0
    %1576 = vmatprep.subr.mxu0 0.0
    %1577 = vmatpush2.msra.mxu0 0.0
    %1578 = vmatprep.subr.mxu0 0.0
    %1579 = vmatpush2.msra.mxu0 0.0
    %1580 = vmatprep.subr.mxu0 0.0
    %1581 = vmatpush2.msra.mxu0 0.0
    %1582 = vmatprep.subr.mxu0 0.0
    %1583 = vmatpush2.msra.mxu0 0.0
    %1584 = vmatprep.subr.mxu0 0.0
    %1585 = vmatpush2.msra.mxu0 0.0
    %1586 = vmatprep.subr.mxu0 0.0
    %1587 = vmatpush2.msra.mxu0 0.0
    %1588 = vmatprep.subr.mxu0 0.0
    %1589 = vmatpush2.msra.mxu0 0.0
    %1590 = vmatprep.subr.mxu0 0.0
    %1591 = vmatpush2.msra.mxu0 0.0
    %1592 = vmatprep.subr.mxu0 0.0
    %1593 = vmatpush2.msra.mxu0 0.0
    %1594 = vmatprep.subr.mxu0 0.0
    %1595 = vmatpush2.msra.mxu0 0.0
    %1596 = vmatprep.mubr.f32.mxu0 0.0
    %1597 = vmatmul.mubr.f32.gmra.mxu0 %v1530
    %v1598 = vpop.f32.mrf.mxu0
    %v1599 = vadd.f32 0.0, %v1598
    %v1600 = vpop.f32.mrf.mxu0
    %1601 = vdwg.mxu0
    %v1603 = vsel %vm410, %v1090, 0
    %1605 = vmatprep.subr.mxu0 0.0
    %1606 = vmatpush1.msra.mxu0 0.0
    %1607 = vmatprep.subr.mxu0 0.0
    %1608 = vmatpush1.msra.mxu0 0.0
    %1609 = vmatprep.subr.mxu0 0.0
    %1610 = vmatpush1.msra.mxu0 0.0
    %1611 = vmatprep.subr.mxu0 0.0
    %1612 = vmatpush1.msra.mxu0 0.0
    %1613 = vmatprep.subr.mxu0 0.0
    %1614 = vmatpush1.msra.mxu0 0.0
    %1615 = vmatprep.subr.mxu0 0.0
    %1616 = vmatpush1.msra.mxu0 0.0
    %1617 = vmatprep.subr.mxu0 0.0
    %1618 = vmatpush1.msra.mxu0 0.0
    %1619 = vmatprep.subr.mxu0 0.0
    %1620 = vmatpush1.msra.mxu0 0.0
    %1621 = vmatprep.subr.mxu0 0.0
    %1622 = vmatpush1.msra.mxu0 0.0
    %1623 = vmatprep.subr.mxu0 0.0
    %1624 = vmatpush1.msra.mxu0 0.0
    %1625 = vmatprep.subr.mxu0 0.0
    %1626 = vmatpush1.msra.mxu0 0.0
    %1627 = vmatprep.subr.mxu0 0.0
    %1628 = vmatpush1.msra.mxu0 0.0
    %1629 = vmatprep.subr.mxu0 0.0
    %1630 = vmatpush1.msra.mxu0 0.0
    %1631 = vmatprep.subr.mxu0 0.0
    %1632 = vmatpush1.msra.mxu0 0.0
    %1633 = vmatprep.subr.mxu0 0.0
    %1634 = vmatpush1.msra.mxu0 0.0
    %1635 = vmatprep.subr.mxu0 0.0
    %1636 = vmatpush1.msra.mxu0 %v407
    %1637 = vmatprep.subr.mxu0 0.0
    %1638 = vmatpush2.msra.mxu0 0.0
    %1639 = vmatprep.subr.mxu0 0.0
    %1640 = vmatpush2.msra.mxu0 0.0
    %1641 = vmatprep.subr.mxu0 0.0
    %1642 = vmatpush2.msra.mxu0 0.0
    %1643 = vmatprep.subr.mxu0 0.0
    %1644 = vmatpush2.msra.mxu0 0.0
    %1645 = vmatprep.subr.mxu0 0.0
    %1646 = vmatpush2.msra.mxu0 0.0
    %1647 = vmatprep.subr.mxu0 0.0
    %1648 = vmatpush2.msra.mxu0 0.0
    %1649 = vmatprep.subr.mxu0 0.0
    %1650 = vmatpush2.msra.mxu0 0.0
    %1651 = vmatprep.subr.mxu0 0.0
    %1652 = vmatpush2.msra.mxu0 0.0
    %1653 = vmatprep.subr.mxu0 0.0
    %1654 = vmatpush2.msra.mxu0 0.0
    %1655 = vmatprep.subr.mxu0 0.0
    %1656 = vmatpush2.msra.mxu0 0.0
    %1657 = vmatprep.subr.mxu0 0.0
    %1658 = vmatpush2.msra.mxu0 0.0
    %1659 = vmatprep.subr.mxu0 0.0
    %1660 = vmatpush2.msra.mxu0 0.0
    %1661 = vmatprep.subr.mxu0 0.0
    %1662 = vmatpush2.msra.mxu0 0.0
    %1663 = vmatprep.subr.mxu0 0.0
    %1664 = vmatpush2.msra.mxu0 0.0
    %1665 = vmatprep.subr.mxu0 0.0
    %1666 = vmatpush2.msra.mxu0 0.0
    %1667 = vmatprep.subr.mxu0 0.0
    %1668 = vmatpush2.msra.mxu0 0.0
    %1669 = vmatprep.mubr.f32.mxu0 0.0
    %1670 = vmatmul.mubr.f32.gmra.mxu0 %v1603
    %v1671 = vpop.f32.mrf.mxu0
    %v1672 = vadd.f32 0.0, %v1671
    %v1673 = vpop.f32.mrf.mxu0
    %1674 = vdwg.mxu0
    %1677 = vrot.lane.b32.xlu0 %v1234, 8
    %v1678 = vpop.permute.xlu0 %1677
    %1679 = vrot.lane.b32.xlu0 %v1526, 8
    %v1680 = vpop.permute.xlu0 %1679
    %1685 = vrot.lane.b32.xlu0 %v1307, 16
    %v1686 = vpop.permute.xlu0 %1685
    %1687 = vrot.lane.b32.xlu0 %v1599, 16
    %v1688 = vpop.permute.xlu0 %1687
    %1693 = vrot.lane.b32.xlu0 %v1380, 24
    %v1694 = vpop.permute.xlu0 %1693
    %1695 = vrot.lane.b32.xlu0 %v1672, 24
    %v1696 = vpop.permute.xlu0 %1695
    %v1699 = vsel %vm410, %v1161, %v1678
    %v1700 = vsel %vm410, %v1453, %v1680
    %v1701 = vsel %vm203, %v1699, %v1686
    %v1702 = vsel %vm203, %v1700, %v1688
    %vm1703 = vcmask 195584
    %v1704 = vsel %vm1703, %v1701, %v1694
    %v1705 = vsel %vm1703, %v1702, %v1696
    %v1706 = vld [vmem:[#allocation11] sm:$0xff]
    %v1707 = vld [vmem:[#allocation11 + $0x8] sm:$0xff]
    %v1708 = vld [vmem:[#allocation11 + $0x10] sm:$0xff]
    %v1709 = vld [vmem:[#allocation11 + $0x18] sm:$0xff]
    %v1710 = vld [vmem:[%s6] sm:$0x1]
    %v1712 = vlaneseq
    %v1713 = vshrl.u32 %v1712, 7
    %v1714 = vsub.s32 0, %v1713
    %v1715 = vrot.slane %v1710, %v1714
    %v1718 = vsel %vm117, %v1704, 0
    %v1721 = vsel %vm117, %v1705, 0
    %1723 = vmatprep.subr.mxu0 0.0
    %1724 = vmatpush1.msra.mxu0 0.0
    %1725 = vmatprep.subr.mxu0 0.0
    %1726 = vmatpush1.msra.mxu0 0.0
    %1727 = vmatprep.subr.mxu0 0.0
    %1728 = vmatpush1.msra.mxu0 0.0
    %1729 = vmatprep.subr.mxu0 0.0
    %1730 = vmatpush1.msra.mxu0 0.0
    %1731 = vmatprep.subr.mxu0 0.0
    %1732 = vmatpush1.msra.mxu0 0.0
    %1733 = vmatprep.subr.mxu0 0.0
    %1734 = vmatpush1.msra.mxu0 0.0
    %1735 = vmatprep.subr.mxu0 0.0
    %1736 = vmatpush1.msra.mxu0 0.0
    %1737 = vmatprep.subr.mxu0 0.0
    %1738 = vmatpush1.msra.mxu0 0.0
    %1739 = vmatprep.subr.mxu0 0.0
    %1740 = vmatpush1.msra.mxu0 0.0
    %1741 = vmatprep.subr.mxu0 0.0
    %1742 = vmatpush1.msra.mxu0 0.0
    %1743 = vmatprep.subr.mxu0 0.0
    %1744 = vmatpush1.msra.mxu0 0.0
    %1745 = vmatprep.subr.mxu0 0.0
    %1746 = vmatpush1.msra.mxu0 0.0
    %1747 = vmatprep.subr.mxu0 0.0
    %1748 = vmatpush1.msra.mxu0 %v1709
    %1749 = vmatprep.subr.mxu0 0.0
    %1750 = vmatpush1.msra.mxu0 %v1708
    %1751 = vmatprep.subr.mxu0 0.0
    %1752 = vmatpush1.msra.mxu0 %v1707
    %1753 = vmatprep.subr.mxu0 0.0
    %1754 = vmatpush1.msra.mxu0 %v1706
    %1755 = vmatprep.subr.mxu0 0.0
    %1756 = vmatpush2.msra.mxu0 0.0
    %1757 = vmatprep.subr.mxu0 0.0
    %1758 = vmatpush2.msra.mxu0 0.0
    %1759 = vmatprep.subr.mxu0 0.0
    %1760 = vmatpush2.msra.mxu0 0.0
    %1761 = vmatprep.subr.mxu0 0.0
    %1762 = vmatpush2.msra.mxu0 0.0
    %1763 = vmatprep.subr.mxu0 0.0
    %1764 = vmatpush2.msra.mxu0 0.0
    %1765 = vmatprep.subr.mxu0 0.0
    %1766 = vmatpush2.msra.mxu0 0.0
    %1767 = vmatprep.subr.mxu0 0.0
    %1768 = vmatpush2.msra.mxu0 0.0
    %1769 = vmatprep.subr.mxu0 0.0
    %1770 = vmatpush2.msra.mxu0 0.0
    %1771 = vmatprep.subr.mxu0 0.0
    %1772 = vmatpush2.msra.mxu0 0.0
    %1773 = vmatprep.subr.mxu0 0.0
    %1774 = vmatpush2.msra.mxu0 0.0
    %1775 = vmatprep.subr.mxu0 0.0
    %1776 = vmatpush2.msra.mxu0 0.0
    %1777 = vmatprep.subr.mxu0 0.0
    %1778 = vmatpush2.msra.mxu0 0.0
    %1779 = vmatprep.subr.mxu0 0.0
    %1780 = vmatpush2.msra.mxu0 0.0
    %1781 = vmatprep.subr.mxu0 0.0
    %1782 = vmatpush2.msra.mxu0 0.0
    %1783 = vmatprep.subr.mxu0 0.0
    %1784 = vmatpush2.msra.mxu0 0.0
    %1785 = vmatprep.subr.mxu0 0.0
    %1786 = vmatpush2.msra.mxu0 0.0
    %1787 = vmatprep.mubr.f32.mxu0 0.0
    %1788 = vmatmul.mubr.f32.gmra.mxu0 %v1718
    %v1789 = vpop.f32.mrf.mxu0
    %v1790 = vadd.f32 %v1715, %v1789
    %v1791 = vpop.f32.mrf.mxu0
    %1792 = vmatprep.mubr.f32.mxu0 0.0
    %1793 = vmatmul.mubr.f32.gmra.mxu0 %v1721
    %v1794 = vpop.f32.mrf.mxu0
    %v1795 = vadd.f32 %v1715, %v1794
    %v1796 = vpop.f32.mrf.mxu0
    %1797 = vdwg.mxu0
    %1798 = vst.msk [vmem:[#allocation13] sm:$0xff] %vm117, %v1790
    %1799 = vst.msk [vmem:[#allocation13 + $0x8] sm:$0xff] %vm117, %v1795
    // Predicated region
    $region54: #{tpu_custom_call.1} parent=1 // pred_check
      _
    $region55: #{tpu_custom_call.1} parent=1 // pred_check_branch
      %1801 = sbr.rel (0) target = $region57
    $region56: #{tpu_custom_call.1} parent=1 // pred_region
      %s1803 = ssub.s32 256, 256
      %1804 = vsyncadd [#allocation4], %s1803
      %s1805 = sshll.u32 [#allocation13], 4
      %s1806 = int_to_ptr.vmem [resolvable:$true] %s1805
      %1811 = dma.vmem_to_hbm [thread:$0]  %s1806, 256, %s7, [#allocation4], 128, 128, 8
    $region57: #{tpu_custom_call.1} parent=1 // pred_fallthru
      _
    // Predicated region
    $region58: #{tpu_custom_call.1} parent=1 // pred_check
      _
    $region59: #{tpu_custom_call.1} parent=1 // pred_check_branch
      %1813 = sbr.rel (0) target = $region61
    $region60: #{tpu_custom_call.1} parent=1 // pred_region
      %1814 = dma.done [#allocation4], 256
    $region61: #{tpu_custom_call.1} parent=1 // pred_fallthru
      _
    %1815 = vsyncpa [#allocation3], 1
    %1816 = vsyncpa [#allocation6], 1
    %1817 = vsyncpa [#allocation9], 1
    %1818 = vsyncpa [#allocation12], 1
    %1819 = vsyncpa [#allocation4], 1

</llo_original>
